<compile_context>
chip_gen: v7x
topology: tpu7x:2x2x1
jax: 0.10.0
libtpu: 0.0.40
codegen_flags: <defaults>
</compile_context>

<pallas_src>
import functools

import jax
import jax.numpy as jnp
from jax.experimental import pallas as pl
from jax.experimental.pallas import tpu as pltpu

N_FEATS = 21            # EMB_NAME = 'onehot' -> FEAT_SIZES['onehot'] = 21
HIDDEN = [32, 32]       # GNN(layers=[32, 32])
NUM_HEADS = 4           # GAT default num_heads
NEG_SLOPE = 0.2         # GAT default alpha (LeakyReLU slope)
NEG_INF = -1e30         # additive mask for non-edges


def _gat_layer0_kernel(adj_ref, feats_ref, w1t_ref, al1_ref, war1_ref,
                       res1t_ref, b1_ref, w2t_ref, a2_ref,
                       h1_ref, wh2_ref, el2t_ref, er2_ref,
                       *, num_heads, f0, slope):
    """GAT layer 0 for one dst-row block + layer-1 projections of that block."""
    t = adj_ref.shape[0]
    row0 = pl.multiple_of(pl.program_id(0) * t, 8)

    h0_all = feats_ref[...]                                   # (N, Fin) all sources
    h0_blk = feats_ref[pl.ds(row0, t), :]                     # (T, Fin) this dst block

    # Full-graph projections (cheap; recomputed per block so the dst grid axis can be
    # "parallel"/megacore-safe with no cross-step scratch).
    wh0 = jnp.dot(h0_all, w1t_ref[...], preferred_element_type=jnp.float32)   # (N, H*F0)
    # el (source term), pre-transposed once -> per-head (1, N) lane rows.
    el0_t = jnp.dot(wh0, al1_ref[...], preferred_element_type=jnp.float32).T  # (H, N)
    # er (dst term) only for this block, via the folded (Fin, H) projection.
    er0 = jnp.dot(h0_blk, war1_ref[...], preferred_element_type=jnp.float32)  # (T, H)

    # -1e30 additive softmax mask rebuilt in-kernel from the int8 adjacency block.
    neg = jnp.where(adj_ref[...].astype(jnp.float32) != 0.0, 0.0, NEG_INF)    # (T, N)

    # Per head: one (T, N) e/p/alpha live at a time; result stored straight into the
    # head's lane range of the (T, H*F0) output ref (flatten aggregation).
    for hd in range(num_heads):
        lo = hd * f0
        e = er0[:, hd:hd + 1] + el0_t[hd:hd + 1, :]           # (T, N) = (T,1)+(1,N)
        e = jnp.where(e >= 0.0, e, slope * e) + neg           # LeakyReLU + edge mask
        e = e - jnp.max(e, axis=1, keepdims=True)
        p = jnp.exp(e)
        alpha = p * pl.reciprocal(jnp.sum(p, axis=1, keepdims=True), approx=True)
        h1_ref[:, lo:lo + f0] = jnp.dot(alpha, wh0[:, lo:lo + f0],
                                        preferred_element_type=jnp.float32)

    # projected residual (Fin != H*F0) + bias + relu  (agg_mode='flatten')
    h1 = h1_ref[...] + jnp.dot(h0_blk, res1t_ref[...],
                               preferred_element_type=jnp.float32) + b1_ref[...]
    h1 = jnp.maximum(h1, 0.0)
    h1_ref[...] = h1

    # Layer-1 projections of this block (consumed by the second kernel): fc output,
    # fused [el | er] attention logits (one matmul), el pre-transposed.
    wh2 = jnp.dot(h1, w2t_ref[...], preferred_element_type=jnp.float32)       # (T, H*F1)
    wh2_ref[...] = wh2
    eler2 = jnp.dot(wh2, a2_ref[...], preferred_element_type=jnp.float32)     # (T, 2H)
    el2t_ref[...] = eler2[:, :num_heads].T                                    # (H, T)
    er2_ref[...] = eler2[:, num_heads:2 * num_heads]                          # (T, H)


def _gat_layer1_dense_kernel(adj_ref, h1blk_ref, er2_ref, wh2_ref, el2t_ref,
                             b2_ref, mean_ref, wdt_ref, bd_ref,
                             att_ref, probs_ref, *, num_heads, f1, slope):
    """GAT layer 1 (agg='mean', relu, identity residual) + dense1 + softmax for one
    dst-row block; per-head attention written directly to the (H, T, N) output block."""
    t = adj_ref.shape[0]
    neg = jnp.where(adj_ref[...].astype(jnp.float32) != 0.0, 0.0, NEG_INF)    # (T, N)

    wh2 = wh2_ref[...]                                        # (N, H*F1) all sources
    el2t = el2t_ref[...]                                      # (H, N)
    er2 = er2_ref[...]                                        # (T, H)

    acc = jnp.zeros((t, f1), jnp.float32)                     # head-sum of aggregates
    for hd in range(num_heads):
        lo = hd * f1
        e = er2[:, hd:hd + 1] + el2t[hd:hd + 1, :]            # (T, N)
        e = jnp.where(e >= 0.0, e, slope * e) + neg
        e = e - jnp.max(e, axis=1, keepdims=True)
        p = jnp.exp(e)
        alpha = p * pl.reciprocal(jnp.sum(p, axis=1, keepdims=True), approx=True)
        att_ref[hd] = alpha                                   # direct (T, N) store
        acc = acc + jnp.dot(alpha, wh2[:, lo:lo + f1],
                            preferred_element_type=jnp.float32)

    # mean over heads (linear): mean(agg) + mean(identity residual + bias), the latter
    # via one MXU matmul against the (H*F1, F1) averaging matrix (no lane-offset adds).
    feats = acc * (1.0 / num_heads) + jnp.dot(
        h1blk_ref[...] + b2_ref[...], mean_ref[...],
        preferred_element_type=jnp.float32)
    feats = jnp.maximum(feats, 0.0)                           # GATLayer activation=relu

    # dense1 + softmax(dim=1); exact divide so rows sum to 1.
    logits = jnp.dot(feats, wdt_ref[...], preferred_element_type=jnp.float32) + bd_ref[...]
    logits = logits - jnp.max(logits, axis=1, keepdims=True)
    p = jnp.exp(logits)
    probs_ref[...] = p / jnp.sum(p, axis=1, keepdims=True)


def _round_up(x, m):
    return ((x + m - 1) // m) * m


def _block_diag_attn(a):
    """(H, F) per-head attention vectors -> (H*F, H) block-diagonal projection."""
    h, f = a.shape
    eye = jnp.eye(h, dtype=a.dtype)
    return (a[:, :, None] * eye[:, None, :]).reshape(h * f, h)


def _vmem_limit(nbytes):
    # floor 32 MiB (v5e scoped default is 16 MiB), cap 64 MiB (v7x physical VMEM);
    # retune t_dst if the per-step footprint exceeds the cap.
    return int(min(max(nbytes, 32 * 1024 * 1024), 64 * 1024 * 1024))


def gnn_forward(adj, feats, params):
    """GNN(model_class='gat', layers=[32, 32]) forward: (probs (N,2), att (H,N,N))."""
    n, fin = feats.shape
    h = NUM_HEADS
    f0, f1 = HIDDEN
    hf0, hf1 = h * f0, h * f1

    # destination-row tiling: one block for small graphs, 256-row blocks otherwise.
    n8 = _round_up(max(n, 8), 8)
    if n8 <= 512:
        t_dst, n_pad = n8, n8
    else:
        t_dst, n_pad = 256, _round_up(n, 256)
    grid = (n_pad // t_dst,)

    # pad + quantize adjacency to int8 (4x less HBM->VMEM traffic than f32 mask);
    # padded rows/cols have no edges and are sliced off the outputs.
    adj_i8 = jnp.zeros((n_pad, n_pad), jnp.int8).at[:n, :n].set(
        (adj > 0).astype(jnp.int8))
    feats_p = jnp.zeros((n_pad, fin), jnp.float32).at[:n, :].set(
        feats.astype(jnp.float32))

    # host-side weight plumbing (outside the kernels).
    w1_t = params['w1'].T                                   # (Fin, H*F0)
    res1_t = params['res1'].T                               # (Fin, H*F0)
    w2_t = params['w2'].T                                   # (H*F0, H*F1)
    wd_t = params['wd'].T                                   # (F1, 2)
    al1 = _block_diag_attn(params['al1'])                   # (H*F0, H)  src term, layer 0
    war1 = w1_t @ _block_diag_attn(params['ar1'])           # (Fin, H)   dst term folded thru fc
    a2 = jnp.concatenate([_block_diag_attn(params['al2']),
                          _block_diag_attn(params['ar2'])], axis=1)   # (H*F1, 2H)
    mean_mat = jnp.tile(jnp.eye(f1, dtype=jnp.float32), (h, 1)) / h   # (H*F1, F1)

    vmem = pl.BlockSpec(memory_space=pltpu.MemorySpace.VMEM)

    # ---- kernel A: GAT layer 0 + layer-1 projections, tiled over dst rows ----------
    vmem_a = _vmem_limit(t_dst * n_pad * (2 + 4 * 4)          # adj blk + mask + e/p/alpha
                         + n_pad * 4 * (fin + hf0 + 2 * h)    # feats + Wh0 + el/er
                         + 4 * t_dst * 4 * hf0                # blocked outputs (2x buf)
                         + (4 << 20))
    kern_a = functools.partial(_gat_layer0_kernel, num_heads=h, f0=f0, slope=NEG_SLOPE)
    h1, wh2, el2t, er2 = pl.pallas_call(
        kern_a,
        grid=grid,
        out_shape=(jax.ShapeDtypeStruct((n_pad, hf0), jnp.float32),
                   jax.ShapeDtypeStruct((n_pad, hf1), jnp.float32),
                   jax.ShapeDtypeStruct((h, n_pad), jnp.float32),
                   jax.ShapeDtypeStruct((n_pad, h), jnp.float32)),
        in_specs=[pl.BlockSpec((t_dst, n_pad), lambda i: (i, 0)),
                  vmem, vmem, vmem, vmem, vmem, vmem, vmem, vmem],
        out_specs=(pl.BlockSpec((t_dst, hf0), lambda i: (i, 0)),
                   pl.BlockSpec((t_dst, hf1), lambda i: (i, 0)),
                   pl.BlockSpec((h, t_dst), lambda i: (0, i)),
                   pl.BlockSpec((t_dst, h), lambda i: (i, 0))),
        compiler_params=pltpu.CompilerParams(
            dimension_semantics=("parallel",), vmem_limit_bytes=vmem_a),
    )(adj_i8, feats_p, w1_t, al1, war1, res1_t, params['b1'], w2_t, a2)

    # ---- kernel B: GAT layer 1 + head-mean + dense1 + softmax, tiled over dst rows --
    vmem_b = _vmem_limit(t_dst * n_pad * (2 + 4 * 4 + 2 * 4 * h)  # adj+mask+temps+att blk
                         + n_pad * 4 * (hf1 + h)                  # Wh2 + el2t residents
                         + (4 << 20))
    kern_b = functools.partial(_gat_layer1_dense_kernel, num_heads=h, f1=f1,
                               slope=NEG_SLOPE)
    att, probs = pl.pallas_call(
        kern_b,
        grid=grid,
        out_shape=(jax.ShapeDtypeStruct((h, n_pad, n_pad), jnp.float32),
                   jax.ShapeDtypeStruct((n_pad, 2), jnp.float32)),
        in_specs=[pl.BlockSpec((t_dst, n_pad), lambda i: (i, 0)),
                  pl.BlockSpec((t_dst, hf0), lambda i: (i, 0)),
                  pl.BlockSpec((t_dst, h), lambda i: (i, 0)),
                  vmem, vmem, vmem, vmem, vmem, vmem],
        out_specs=(pl.BlockSpec((h, t_dst, n_pad), lambda i: (0, i, 0)),
                   pl.BlockSpec((t_dst, 2), lambda i: (i, 0))),
        compiler_params=pltpu.CompilerParams(
            dimension_semantics=("parallel",), vmem_limit_bytes=vmem_b),
    )(adj_i8, h1, er2, wh2, el2t, params['b2'], mean_mat, wd_t, params['bd'])

    if n_pad != n:
        probs = probs[:n]
        att = att[:, :n, :n]
    return probs, att


if __name__ == "__main__":
    key = jax.random.PRNGKey(0)
    ks = jax.random.split(key, 10)

    N = 8
    in_feat = jax.random.normal(ks[0], (N, N_FEATS), jnp.float32)

    # small deterministic graph: self-loops + ring edge (i+1)%N -> i
    adj = jnp.eye(N, dtype=jnp.float32) + jnp.roll(jnp.eye(N, dtype=jnp.float32), 1, axis=1)
    adj = jnp.minimum(adj, 1.0)

    def glorot(k, shape):
        fan_out, fan_in = shape[0], shape[-1]
        lim = (6.0 / (fan_in + fan_out)) ** 0.5
        return jax.random.uniform(k, shape, jnp.float32, -lim, lim)

    H0, H1 = HIDDEN
    params = dict(
        # layer 0: in=21, out=32, heads=4 (residual needs a projection: 21 != 128)
        w1=glorot(ks[1], (NUM_HEADS * H0, N_FEATS)),
        al1=glorot(ks[2], (NUM_HEADS, H0)),
        ar1=glorot(ks[3], (NUM_HEADS, H0)),
        res1=glorot(ks[4], (NUM_HEADS * H0, N_FEATS)),
        b1=jnp.zeros((1, NUM_HEADS * H0), jnp.float32),
        # layer 1: in=128, out=32, heads=4 (in == H*out -> identity residual, no weight)
        w2=glorot(ks[5], (NUM_HEADS * H1, NUM_HEADS * H0)),
        al2=glorot(ks[6], (NUM_HEADS, H1)),
        ar2=glorot(ks[7], (NUM_HEADS, H1)),
        b2=jnp.zeros((1, NUM_HEADS * H1), jnp.float32),
        # dense1: Linear(32, 2)
        wd=glorot(ks[8], (2, H1)),
        bd=jnp.zeros((1, 2), jnp.float32),
    )

    probs, att = jax.jit(gnn_forward)(adj, in_feat, params)
    jax.block_until_ready((probs, att))
    assert probs.shape == (N, 2)
    assert att.shape == (NUM_HEADS, N, N)
    print("KERNEL_OK")
</pallas_src>

<mosaic_0001>
module attributes {stable_mosaic.version = 11 : i64} {
  func.func @_gat_layer0_kernel(%arg0: i32, %arg1: memref<8x8xi8, #tpu.memory_space<vmem>>, %arg2: memref<8x21xf32, #tpu.memory_space<vmem>>, %arg3: memref<21x128xf32, #tpu.memory_space<vmem>>, %arg4: memref<128x4xf32, #tpu.memory_space<vmem>>, %arg5: memref<21x4xf32, #tpu.memory_space<vmem>>, %arg6: memref<21x128xf32, #tpu.memory_space<vmem>>, %arg7: memref<1x128xf32, #tpu.memory_space<vmem>>, %arg8: memref<128x128xf32, #tpu.memory_space<vmem>>, %arg9: memref<128x8xf32, #tpu.memory_space<vmem>>, %arg10: memref<8x128xf32, #tpu.memory_space<vmem>>, %arg11: memref<8x128xf32, #tpu.memory_space<vmem>>, %arg12: memref<4x8xf32, #tpu.memory_space<vmem>>, %arg13: memref<8x4xf32, #tpu.memory_space<vmem>>) attributes {dimension_semantics = [#tpu.dimension_semantics<parallel>], iteration_bounds = array<i64: 1>, scalar_prefetch = 0 : i64, scratch_operands = 0 : i64, tpu.core_type = #tpu.core_type<tc>, window_params = [{transform_indices = @transform_0, window_bounds = array<i64: 8, 8>}, {pipeline_mode = #tpu.pipeline_mode<synchronous>, transform_indices = @transform_1, window_bounds = array<i64: 8, 21>}, {pipeline_mode = #tpu.pipeline_mode<synchronous>, transform_indices = @transform_2, window_bounds = array<i64: 21, 128>}, {pipeline_mode = #tpu.pipeline_mode<synchronous>, transform_indices = @transform_3, window_bounds = array<i64: 128, 4>}, {pipeline_mode = #tpu.pipeline_mode<synchronous>, transform_indices = @transform_4, window_bounds = array<i64: 21, 4>}, {pipeline_mode = #tpu.pipeline_mode<synchronous>, transform_indices = @transform_5, window_bounds = array<i64: 21, 128>}, {pipeline_mode = #tpu.pipeline_mode<synchronous>, transform_indices = @transform_6, window_bounds = array<i64: 1, 128>}, {pipeline_mode = #tpu.pipeline_mode<synchronous>, transform_indices = @transform_7, window_bounds = array<i64: 128, 128>}, {pipeline_mode = #tpu.pipeline_mode<synchronous>, transform_indices = @transform_8, window_bounds = array<i64: 128, 8>}, {transform_indices = @transform_9, window_bounds = array<i64: 8, 128>}, {transform_indices = @transform_10, window_bounds = array<i64: 8, 128>}, {transform_indices = @transform_11, window_bounds = array<i64: 4, 8>}, {transform_indices = @transform_12, window_bounds = array<i64: 8, 4>}]} {
    %c8_i32 = arith.constant 8 : i32
    %0 = arith.muli %arg0, %c8_i32 : i32
    %1 = tpu.assume_multiple %0, 8 : i32
    %c0 = arith.constant 0 : index
    %c0_0 = arith.constant 0 : index
    %2 = vector.load %arg2[%c0, %c0_0] : memref<8x21xf32, #tpu.memory_space<vmem>>, vector<8x21xf32>
    %3 = arith.index_cast %1 : i32 to index
    %c0_1 = arith.constant 0 : index
    %4 = vector.load %arg2[%3, %c0_1] : memref<8x21xf32, #tpu.memory_space<vmem>>, vector<8x21xf32>
    %c0_2 = arith.constant 0 : index
    %c0_3 = arith.constant 0 : index
    %5 = vector.load %arg3[%c0_2, %c0_3] : memref<21x128xf32, #tpu.memory_space<vmem>>, vector<21x128xf32>
    %cst = arith.constant dense<0.000000e+00> : vector<8x128xf32>
    %6 = tpu.matmul %2, %5, %cst {dimension_numbers = #tpu.dot_dimension_numbers<[1], [0], [0], [1], [0, 0, 1, 1], [], []>} : vector<8x21xf32>, vector<21x128xf32>, vector<8x128xf32> -> vector<8x128xf32>
    %c0_4 = arith.constant 0 : index
    %c0_5 = arith.constant 0 : index
    %7 = vector.load %arg4[%c0_4, %c0_5] : memref<128x4xf32, #tpu.memory_space<vmem>>, vector<128x4xf32>
    %cst_6 = arith.constant dense<0.000000e+00> : vector<8x4xf32>
    %8 = tpu.matmul %6, %7, %cst_6 {dimension_numbers = #tpu.dot_dimension_numbers<[1], [0], [0], [1], [0, 0, 1, 1], [], []>} : vector<8x128xf32>, vector<128x4xf32>, vector<8x4xf32> -> vector<8x4xf32>
    %9 = tpu.transpose %8, [1, 0] : vector<8x4xf32> -> vector<4x8xf32>
    %c0_7 = arith.constant 0 : index
    %c0_8 = arith.constant 0 : index
    %10 = vector.load %arg5[%c0_7, %c0_8] : memref<21x4xf32, #tpu.memory_space<vmem>>, vector<21x4xf32>
    %cst_9 = arith.constant dense<0.000000e+00> : vector<8x4xf32>
    %11 = tpu.matmul %4, %10, %cst_9 {dimension_numbers = #tpu.dot_dimension_numbers<[1], [0], [0], [1], [0, 0, 1, 1], [], []>} : vector<8x21xf32>, vector<21x4xf32>, vector<8x4xf32> -> vector<8x4xf32>
    %c0_10 = arith.constant 0 : index
    %c0_11 = arith.constant 0 : index
    %12 = vector.load %arg1[%c0_10, %c0_11] : memref<8x8xi8, #tpu.memory_space<vmem>>, vector<8x8xi8>
    %13 = arith.sitofp %12 : vector<8x8xi8> to vector<8x8xf32>
    %cst_12 = arith.constant 0.000000e+00 : f32
    %14 = vector.broadcast %cst_12 : f32 to vector<8x8xf32>
    %15 = arith.cmpf one, %13, %14 : vector<8x8xf32>
    %cst_13 = arith.constant 0.000000e+00 : f32
    %cst_14 = arith.constant -1.000000e+30 : f32
    %16 = vector.broadcast %cst_13 : f32 to vector<8x8xf32>
    %17 = vector.broadcast %cst_14 : f32 to vector<8x8xf32>
    %18 = arith.select %15, %16, %17 : vector<8x8xi1>, vector<8x8xf32>
    %19 = vector.extract_strided_slice %11 {offsets = [0, 0], sizes = [8, 1], strides = [1, 1]} : vector<8x4xf32> to vector<8x1xf32>
    %20 = vector.extract_strided_slice %9 {offsets = [0, 0], sizes = [1, 8], strides = [1, 1]} : vector<4x8xf32> to vector<1x8xf32>
    %21 = vector.broadcast %19 : vector<8x1xf32> to vector<8x8xf32>
    %22 = vector.broadcast %20 : vector<1x8xf32> to vector<8x8xf32>
    %23 = arith.addf %21, %22 : vector<8x8xf32>
    %cst_15 = arith.constant 0.000000e+00 : f32
    %24 = vector.broadcast %cst_15 : f32 to vector<8x8xf32>
    %25 = arith.cmpf oge, %23, %24 : vector<8x8xf32>
    %cst_16 = arith.constant 2.000000e-01 : f32
    %26 = vector.broadcast %cst_16 : f32 to vector<8x8xf32>
    %27 = arith.mulf %26, %23 : vector<8x8xf32>
    %28 = arith.select %25, %23, %27 : vector<8x8xi1>, vector<8x8xf32>
    %29 = arith.addf %28, %18 : vector<8x8xf32>
    %cst_17 = arith.constant dense<0xFF800000> : vector<8xf32>
    %30 = vector.multi_reduction <maximumf>, %29, %cst_17 [1] : vector<8x8xf32> to vector<8xf32>
    %31 = vector.shape_cast %30 : vector<8xf32> to vector<8x1xf32>
    %32 = vector.broadcast %31 : vector<8x1xf32> to vector<8x8xf32>
    %33 = arith.subf %29, %32 : vector<8x8xf32>
    %34 = math.exp %33 : vector<8x8xf32>
    %cst_18 = arith.constant dense<0.000000e+00> : vector<8xf32>
    %35 = vector.multi_reduction <add>, %34, %cst_18 [1] : vector<8x8xf32> to vector<8xf32>
    %36 = vector.shape_cast %35 : vector<8xf32> to vector<8x1xf32>
    %37 = tpu.reciprocal %36 {approx = true} : vector<8x1xf32> -> vector<8x1xf32>
    %38 = vector.broadcast %37 : vector<8x1xf32> to vector<8x8xf32>
    %39 = arith.mulf %34, %38 : vector<8x8xf32>
    %40 = vector.extract_strided_slice %6 {offsets = [0, 0], sizes = [8, 32], strides = [1, 1]} : vector<8x128xf32> to vector<8x32xf32>
    %cst_19 = arith.constant dense<0.000000e+00> : vector<8x32xf32>
    %41 = tpu.matmul %39, %40, %cst_19 {dimension_numbers = #tpu.dot_dimension_numbers<[1], [0], [0], [1], [0, 0, 1, 1], [], []>} : vector<8x8xf32>, vector<8x32xf32>, vector<8x32xf32> -> vector<8x32xf32>
    %c0_20 = arith.constant 0 : index
    %c0_21 = arith.constant 0 : index
    %42 = vector.load %arg10[%c0_20, %c0_21] : memref<8x128xf32, #tpu.memory_space<vmem>>, vector<8x32xf32>
    tpu.vector_store %arg10[%c0_20, %c0_21], %41 {strides = array<i32>} : memref<8x128xf32, #tpu.memory_space<vmem>>, vector<8x32xf32>,
    %43 = vector.extract_strided_slice %11 {offsets = [0, 1], sizes = [8, 1], strides = [1, 1]} : vector<8x4xf32> to vector<8x1xf32>
    %44 = vector.extract_strided_slice %9 {offsets = [1, 0], sizes = [1, 8], strides = [1, 1]} : vector<4x8xf32> to vector<1x8xf32>
    %45 = vector.broadcast %43 : vector<8x1xf32> to vector<8x8xf32>
    %46 = vector.broadcast %44 : vector<1x8xf32> to vector<8x8xf32>
    %47 = arith.addf %45, %46 : vector<8x8xf32>
    %cst_22 = arith.constant 0.000000e+00 : f32
    %48 = vector.broadcast %cst_22 : f32 to vector<8x8xf32>
    %49 = arith.cmpf oge, %47, %48 : vector<8x8xf32>
    %cst_23 = arith.constant 2.000000e-01 : f32
    %50 = vector.broadcast %cst_23 : f32 to vector<8x8xf32>
    %51 = arith.mulf %50, %47 : vector<8x8xf32>
    %52 = arith.select %49, %47, %51 : vector<8x8xi1>, vector<8x8xf32>
    %53 = arith.addf %52, %18 : vector<8x8xf32>
    %cst_24 = arith.constant dense<0xFF800000> : vector<8xf32>
    %54 = vector.multi_reduction <maximumf>, %53, %cst_24 [1] : vector<8x8xf32> to vector<8xf32>
    %55 = vector.shape_cast %54 : vector<8xf32> to vector<8x1xf32>
    %56 = vector.broadcast %55 : vector<8x1xf32> to vector<8x8xf32>
    %57 = arith.subf %53, %56 : vector<8x8xf32>
    %58 = math.exp %57 : vector<8x8xf32>
    %cst_25 = arith.constant dense<0.000000e+00> : vector<8xf32>
    %59 = vector.multi_reduction <add>, %58, %cst_25 [1] : vector<8x8xf32> to vector<8xf32>
    %60 = vector.shape_cast %59 : vector<8xf32> to vector<8x1xf32>
    %61 = tpu.reciprocal %60 {approx = true} : vector<8x1xf32> -> vector<8x1xf32>
    %62 = vector.broadcast %61 : vector<8x1xf32> to vector<8x8xf32>
    %63 = arith.mulf %58, %62 : vector<8x8xf32>
    %64 = vector.extract_strided_slice %6 {offsets = [0, 32], sizes = [8, 32], strides = [1, 1]} : vector<8x128xf32> to vector<8x32xf32>
    %cst_26 = arith.constant dense<0.000000e+00> : vector<8x32xf32>
    %65 = tpu.matmul %63, %64, %cst_26 {dimension_numbers = #tpu.dot_dimension_numbers<[1], [0], [0], [1], [0, 0, 1, 1], [], []>} : vector<8x8xf32>, vector<8x32xf32>, vector<8x32xf32> -> vector<8x32xf32>
    %c0_27 = arith.constant 0 : index
    %c32 = arith.constant 32 : index
    %66 = vector.load %arg10[%c0_27, %c32] : memref<8x128xf32, #tpu.memory_space<vmem>>, vector<8x32xf32>
    tpu.vector_store %arg10[%c0_27, %c32], %65 {strides = array<i32>} : memref<8x128xf32, #tpu.memory_space<vmem>>, vector<8x32xf32>,
    %67 = vector.extract_strided_slice %11 {offsets = [0, 2], sizes = [8, 1], strides = [1, 1]} : vector<8x4xf32> to vector<8x1xf32>
    %68 = vector.extract_strided_slice %9 {offsets = [2, 0], sizes = [1, 8], strides = [1, 1]} : vector<4x8xf32> to vector<1x8xf32>
    %69 = vector.broadcast %67 : vector<8x1xf32> to vector<8x8xf32>
    %70 = vector.broadcast %68 : vector<1x8xf32> to vector<8x8xf32>
    %71 = arith.addf %69, %70 : vector<8x8xf32>
    %cst_28 = arith.constant 0.000000e+00 : f32
    %72 = vector.broadcast %cst_28 : f32 to vector<8x8xf32>
    %73 = arith.cmpf oge, %71, %72 : vector<8x8xf32>
    %cst_29 = arith.constant 2.000000e-01 : f32
    %74 = vector.broadcast %cst_29 : f32 to vector<8x8xf32>
    %75 = arith.mulf %74, %71 : vector<8x8xf32>
    %76 = arith.select %73, %71, %75 : vector<8x8xi1>, vector<8x8xf32>
    %77 = arith.addf %76, %18 : vector<8x8xf32>
    %cst_30 = arith.constant dense<0xFF800000> : vector<8xf32>
    %78 = vector.multi_reduction <maximumf>, %77, %cst_30 [1] : vector<8x8xf32> to vector<8xf32>
    %79 = vector.shape_cast %78 : vector<8xf32> to vector<8x1xf32>
    %80 = vector.broadcast %79 : vector<8x1xf32> to vector<8x8xf32>
    %81 = arith.subf %77, %80 : vector<8x8xf32>
    %82 = math.exp %81 : vector<8x8xf32>
    %cst_31 = arith.constant dense<0.000000e+00> : vector<8xf32>
    %83 = vector.multi_reduction <add>, %82, %cst_31 [1] : vector<8x8xf32> to vector<8xf32>
    %84 = vector.shape_cast %83 : vector<8xf32> to vector<8x1xf32>
    %85 = tpu.reciprocal %84 {approx = true} : vector<8x1xf32> -> vector<8x1xf32>
    %86 = vector.broadcast %85 : vector<8x1xf32> to vector<8x8xf32>
    %87 = arith.mulf %82, %86 : vector<8x8xf32>
    %88 = vector.extract_strided_slice %6 {offsets = [0, 64], sizes = [8, 32], strides = [1, 1]} : vector<8x128xf32> to vector<8x32xf32>
    %cst_32 = arith.constant dense<0.000000e+00> : vector<8x32xf32>
    %89 = tpu.matmul %87, %88, %cst_32 {dimension_numbers = #tpu.dot_dimension_numbers<[1], [0], [0], [1], [0, 0, 1, 1], [], []>} : vector<8x8xf32>, vector<8x32xf32>, vector<8x32xf32> -> vector<8x32xf32>
    %c0_33 = arith.constant 0 : index
    %c64 = arith.constant 64 : index
    %90 = vector.load %arg10[%c0_33, %c64] : memref<8x128xf32, #tpu.memory_space<vmem>>, vector<8x32xf32>
    tpu.vector_store %arg10[%c0_33, %c64], %89 {strides = array<i32>} : memref<8x128xf32, #tpu.memory_space<vmem>>, vector<8x32xf32>,
    %91 = vector.extract_strided_slice %11 {offsets = [0, 3], sizes = [8, 1], strides = [1, 1]} : vector<8x4xf32> to vector<8x1xf32>
    %92 = vector.extract_strided_slice %9 {offsets = [3, 0], sizes = [1, 8], strides = [1, 1]} : vector<4x8xf32> to vector<1x8xf32>
    %93 = vector.broadcast %91 : vector<8x1xf32> to vector<8x8xf32>
    %94 = vector.broadcast %92 : vector<1x8xf32> to vector<8x8xf32>
    %95 = arith.addf %93, %94 : vector<8x8xf32>
    %cst_34 = arith.constant 0.000000e+00 : f32
    %96 = vector.broadcast %cst_34 : f32 to vector<8x8xf32>
    %97 = arith.cmpf oge, %95, %96 : vector<8x8xf32>
    %cst_35 = arith.constant 2.000000e-01 : f32
    %98 = vector.broadcast %cst_35 : f32 to vector<8x8xf32>
    %99 = arith.mulf %98, %95 : vector<8x8xf32>
    %100 = arith.select %97, %95, %99 : vector<8x8xi1>, vector<8x8xf32>
    %101 = arith.addf %100, %18 : vector<8x8xf32>
    %cst_36 = arith.constant dense<0xFF800000> : vector<8xf32>
    %102 = vector.multi_reduction <maximumf>, %101, %cst_36 [1] : vector<8x8xf32> to vector<8xf32>
    %103 = vector.shape_cast %102 : vector<8xf32> to vector<8x1xf32>
    %104 = vector.broadcast %103 : vector<8x1xf32> to vector<8x8xf32>
    %105 = arith.subf %101, %104 : vector<8x8xf32>
    %106 = math.exp %105 : vector<8x8xf32>
    %cst_37 = arith.constant dense<0.000000e+00> : vector<8xf32>
    %107 = vector.multi_reduction <add>, %106, %cst_37 [1] : vector<8x8xf32> to vector<8xf32>
    %108 = vector.shape_cast %107 : vector<8xf32> to vector<8x1xf32>
    %109 = tpu.reciprocal %108 {approx = true} : vector<8x1xf32> -> vector<8x1xf32>
    %110 = vector.broadcast %109 : vector<8x1xf32> to vector<8x8xf32>
    %111 = arith.mulf %106, %110 : vector<8x8xf32>
    %112 = vector.extract_strided_slice %6 {offsets = [0, 96], sizes = [8, 32], strides = [1, 1]} : vector<8x128xf32> to vector<8x32xf32>
    %cst_38 = arith.constant dense<0.000000e+00> : vector<8x32xf32>
    %113 = tpu.matmul %111, %112, %cst_38 {dimension_numbers = #tpu.dot_dimension_numbers<[1], [0], [0], [1], [0, 0, 1, 1], [], []>} : vector<8x8xf32>, vector<8x32xf32>, vector<8x32xf32> -> vector<8x32xf32>
    %c0_39 = arith.constant 0 : index
    %c96 = arith.constant 96 : index
    %114 = vector.load %arg10[%c0_39, %c96] : memref<8x128xf32, #tpu.memory_space<vmem>>, vector<8x32xf32>
    tpu.vector_store %arg10[%c0_39, %c96], %113 {strides = array<i32>} : memref<8x128xf32, #tpu.memory_space<vmem>>, vector<8x32xf32>,
    %c0_40 = arith.constant 0 : index
    %c0_41 = arith.constant 0 : index
    %115 = vector.load %arg10[%c0_40, %c0_41] : memref<8x128xf32, #tpu.memory_space<vmem>>, vector<8x128xf32>
    %c0_42 = arith.constant 0 : index
    %c0_43 = arith.constant 0 : index
    %116 = vector.load %arg6[%c0_42, %c0_43] : memref<21x128xf32, #tpu.memory_space<vmem>>, vector<21x128xf32>
    %cst_44 = arith.constant dense<0.000000e+00> : vector<8x128xf32>
    %117 = tpu.matmul %4, %116, %cst_44 {dimension_numbers = #tpu.dot_dimension_numbers<[1], [0], [0], [1], [0, 0, 1, 1], [], []>} : vector<8x21xf32>, vector<21x128xf32>, vector<8x128xf32> -> vector<8x128xf32>
    %118 = arith.addf %115, %117 : vector<8x128xf32>
    %c0_45 = arith.constant 0 : index
    %c0_46 = arith.constant 0 : index
    %119 = vector.load %arg7[%c0_45, %c0_46] : memref<1x128xf32, #tpu.memory_space<vmem>>, vector<1x128xf32>
    %120 = vector.broadcast %119 : vector<1x128xf32> to vector<8x128xf32>
    %121 = arith.addf %118, %120 : vector<8x128xf32>
    %cst_47 = arith.constant 0.000000e+00 : f32
    %122 = vector.broadcast %cst_47 : f32 to vector<8x128xf32>
    %123 = arith.maximumf %121, %122 : vector<8x128xf32>
    %c0_48 = arith.constant 0 : index
    %c0_49 = arith.constant 0 : index
    %124 = vector.load %arg10[%c0_48, %c0_49] : memref<8x128xf32, #tpu.memory_space<vmem>>, vector<8x128xf32>
    tpu.vector_store %arg10[%c0_48, %c0_49], %123 {strides = array<i32>} : memref<8x128xf32, #tpu.memory_space<vmem>>, vector<8x128xf32>,
    %c0_50 = arith.constant 0 : index
    %c0_51 = arith.constant 0 : index
    %125 = vector.load %arg8[%c0_50, %c0_51] : memref<128x128xf32, #tpu.memory_space<vmem>>, vector<128x128xf32>
    %cst_52 = arith.constant dense<0.000000e+00> : vector<8x128xf32>
    %126 = tpu.matmul %123, %125, %cst_52 {dimension_numbers = #tpu.dot_dimension_numbers<[1], [0], [0], [1], [0, 0, 1, 1], [], []>} : vector<8x128xf32>, vector<128x128xf32>, vector<8x128xf32> -> vector<8x128xf32>
    %c0_53 = arith.constant 0 : index
    %c0_54 = arith.constant 0 : index
    %127 = vector.load %arg11[%c0_53, %c0_54] : memref<8x128xf32, #tpu.memory_space<vmem>>, vector<8x128xf32>
    tpu.vector_store %arg11[%c0_53, %c0_54], %126 {strides = array<i32>} : memref<8x128xf32, #tpu.memory_space<vmem>>, vector<8x128xf32>,
    %c0_55 = arith.constant 0 : index
    %c0_56 = arith.constant 0 : index
    %128 = vector.load %arg9[%c0_55, %c0_56] : memref<128x8xf32, #tpu.memory_space<vmem>>, vector<128x8xf32>
    %cst_57 = arith.constant dense<0.000000e+00> : vector<8x8xf32>
    %129 = tpu.matmul %126, %128, %cst_57 {dimension_numbers = #tpu.dot_dimension_numbers<[1], [0], [0], [1], [0, 0, 1, 1], [], []>} : vector<8x128xf32>, vector<128x8xf32>, vector<8x8xf32> -> vector<8x8xf32>
    %130 = vector.extract_strided_slice %129 {offsets = [0, 0], sizes = [8, 4], strides = [1, 1]} : vector<8x8xf32> to vector<8x4xf32>
    %131 = tpu.transpose %130, [1, 0] : vector<8x4xf32> -> vector<4x8xf32>
    %c0_58 = arith.constant 0 : index
    %c0_59 = arith.constant 0 : index
    %132 = vector.load %arg12[%c0_58, %c0_59] : memref<4x8xf32, #tpu.memory_space<vmem>>, vector<4x8xf32>
    tpu.vector_store %arg12[%c0_58, %c0_59], %131 {strides = array<i32>} : memref<4x8xf32, #tpu.memory_space<vmem>>, vector<4x8xf32>,
    %133 = vector.extract_strided_slice %129 {offsets = [0, 4], sizes = [8, 4], strides = [1, 1]} : vector<8x8xf32> to vector<8x4xf32>
    %c0_60 = arith.constant 0 : index
    %c0_61 = arith.constant 0 : index
    %134 = vector.load %arg13[%c0_60, %c0_61] : memref<8x4xf32, #tpu.memory_space<vmem>>, vector<8x4xf32>
    tpu.vector_store %arg13[%c0_60, %c0_61], %133 {strides = array<i32>} : memref<8x4xf32, #tpu.memory_space<vmem>>, vector<8x4xf32>,
    return
  }
  func.func @transform_0(%arg0: i32) -> (i32, i32) {
    %c0_i32 = arith.constant 0 : i32
    %c0_i32_0 = arith.constant 0 : i32
    return %arg0, %c0_i32 : i32, i32
  }
  func.func @transform_1(%arg0: i32) -> (i32, i32) {
    %c0_i32 = arith.constant 0 : i32
    %c0_i32_0 = arith.constant 0 : i32
    %c0_i32_1 = arith.constant 0 : i32
    return %c0_i32, %c0_i32_0 : i32, i32
  }
  func.func @transform_2(%arg0: i32) -> (i32, i32) {
    %c0_i32 = arith.constant 0 : i32
    %c0_i32_0 = arith.constant 0 : i32
    %c0_i32_1 = arith.constant 0 : i32
    return %c0_i32, %c0_i32_0 : i32, i32
  }
  func.func @transform_3(%arg0: i32) -> (i32, i32) {
    %c0_i32 = arith.constant 0 : i32
    %c0_i32_0 = arith.constant 0 : i32
    %c0_i32_1 = arith.constant 0 : i32
    return %c0_i32, %c0_i32_0 : i32, i32
  }
  func.func @transform_4(%arg0: i32) -> (i32, i32) {
    %c0_i32 = arith.constant 0 : i32
    %c0_i32_0 = arith.constant 0 : i32
    %c0_i32_1 = arith.constant 0 : i32
    return %c0_i32, %c0_i32_0 : i32, i32
  }
  func.func @transform_5(%arg0: i32) -> (i32, i32) {
    %c0_i32 = arith.constant 0 : i32
    %c0_i32_0 = arith.constant 0 : i32
    %c0_i32_1 = arith.constant 0 : i32
    return %c0_i32, %c0_i32_0 : i32, i32
  }
  func.func @transform_6(%arg0: i32) -> (i32, i32) {
    %c0_i32 = arith.constant 0 : i32
    %c0_i32_0 = arith.constant 0 : i32
    %c0_i32_1 = arith.constant 0 : i32
    return %c0_i32, %c0_i32_0 : i32, i32
  }
  func.func @transform_7(%arg0: i32) -> (i32, i32) {
    %c0_i32 = arith.constant 0 : i32
    %c0_i32_0 = arith.constant 0 : i32
    %c0_i32_1 = arith.constant 0 : i32
    return %c0_i32, %c0_i32_0 : i32, i32
  }
  func.func @transform_8(%arg0: i32) -> (i32, i32) {
    %c0_i32 = arith.constant 0 : i32
    %c0_i32_0 = arith.constant 0 : i32
    %c0_i32_1 = arith.constant 0 : i32
    return %c0_i32, %c0_i32_0 : i32, i32
  }
  func.func @transform_9(%arg0: i32) -> (i32, i32) {
    %c0_i32 = arith.constant 0 : i32
    %c0_i32_0 = arith.constant 0 : i32
    return %arg0, %c0_i32 : i32, i32
  }
  func.func @transform_10(%arg0: i32) -> (i32, i32) {
    %c0_i32 = arith.constant 0 : i32
    %c0_i32_0 = arith.constant 0 : i32
    return %arg0, %c0_i32 : i32, i32
  }
  func.func @transform_11(%arg0: i32) -> (i32, i32) {
    %c0_i32 = arith.constant 0 : i32
    %c0_i32_0 = arith.constant 0 : i32
    return %c0_i32, %arg0 : i32, i32
  }
  func.func @transform_12(%arg0: i32) -> (i32, i32) {
    %c0_i32 = arith.constant 0 : i32
    %c0_i32_0 = arith.constant 0 : i32
    return %arg0, %c0_i32 : i32, i32
  }
}

module attributes {stable_mosaic.version = 11 : i64} {
  func.func @_gat_layer1_dense_kernel(%arg0: i32, %arg1: memref<8x8xi8, #tpu.memory_space<vmem>>, %arg2: memref<8x128xf32, #tpu.memory_space<vmem>>, %arg3: memref<8x4xf32, #tpu.memory_space<vmem>>, %arg4: memref<8x128xf32, #tpu.memory_space<vmem>>, %arg5: memref<4x8xf32, #tpu.memory_space<vmem>>, %arg6: memref<1x128xf32, #tpu.memory_space<vmem>>, %arg7: memref<128x32xf32, #tpu.memory_space<vmem>>, %arg8: memref<32x2xf32, #tpu.memory_space<vmem>>, %arg9: memref<1x2xf32, #tpu.memory_space<vmem>>, %arg10: memref<4x8x8xf32, #tpu.memory_space<vmem>>, %arg11: memref<8x2xf32, #tpu.memory_space<vmem>>) attributes {dimension_semantics = [#tpu.dimension_semantics<parallel>], iteration_bounds = array<i64: 1>, scalar_prefetch = 0 : i64, scratch_operands = 0 : i64, tpu.core_type = #tpu.core_type<tc>, window_params = [{transform_indices = @transform_0, window_bounds = array<i64: 8, 8>}, {transform_indices = @transform_1, window_bounds = array<i64: 8, 128>}, {transform_indices = @transform_2, window_bounds = array<i64: 8, 4>}, {pipeline_mode = #tpu.pipeline_mode<synchronous>, transform_indices = @transform_3, window_bounds = array<i64: 8, 128>}, {pipeline_mode = #tpu.pipeline_mode<synchronous>, transform_indices = @transform_4, window_bounds = array<i64: 4, 8>}, {pipeline_mode = #tpu.pipeline_mode<synchronous>, transform_indices = @transform_5, window_bounds = array<i64: 1, 128>}, {pipeline_mode = #tpu.pipeline_mode<synchronous>, transform_indices = @transform_6, window_bounds = array<i64: 128, 32>}, {pipeline_mode = #tpu.pipeline_mode<synchronous>, transform_indices = @transform_7, window_bounds = array<i64: 32, 2>}, {pipeline_mode = #tpu.pipeline_mode<synchronous>, transform_indices = @transform_8, window_bounds = array<i64: 1, 2>}, {transform_indices = @transform_9, window_bounds = array<i64: 4, 8, 8>}, {transform_indices = @transform_10, window_bounds = array<i64: 8, 2>}]} {
    %c0 = arith.constant 0 : index
    %c0_0 = arith.constant 0 : index
    %0 = vector.load %arg1[%c0, %c0_0] : memref<8x8xi8, #tpu.memory_space<vmem>>, vector<8x8xi8>
    %1 = arith.sitofp %0 : vector<8x8xi8> to vector<8x8xf32>
    %cst = arith.constant 0.000000e+00 : f32
    %2 = vector.broadcast %cst : f32 to vector<8x8xf32>
    %3 = arith.cmpf one, %1, %2 : vector<8x8xf32>
    %cst_1 = arith.constant 0.000000e+00 : f32
    %cst_2 = arith.constant -1.000000e+30 : f32
    %4 = vector.broadcast %cst_1 : f32 to vector<8x8xf32>
    %5 = vector.broadcast %cst_2 : f32 to vector<8x8xf32>
    %6 = arith.select %3, %4, %5 : vector<8x8xi1>, vector<8x8xf32>
    %c0_3 = arith.constant 0 : index
    %c0_4 = arith.constant 0 : index
    %7 = vector.load %arg4[%c0_3, %c0_4] : memref<8x128xf32, #tpu.memory_space<vmem>>, vector<8x128xf32>
    %c0_5 = arith.constant 0 : index
    %c0_6 = arith.constant 0 : index
    %8 = vector.load %arg5[%c0_5, %c0_6] : memref<4x8xf32, #tpu.memory_space<vmem>>, vector<4x8xf32>
    %c0_7 = arith.constant 0 : index
    %c0_8 = arith.constant 0 : index
    %9 = vector.load %arg3[%c0_7, %c0_8] : memref<8x4xf32, #tpu.memory_space<vmem>>, vector<8x4xf32>
    %cst_9 = arith.constant 0.000000e+00 : f32
    %10 = vector.broadcast %cst_9 : f32 to vector<8x32xf32>
    %11 = vector.extract_strided_slice %9 {offsets = [0, 0], sizes = [8, 1], strides = [1, 1]} : vector<8x4xf32> to vector<8x1xf32>
    %12 = vector.extract_strided_slice %8 {offsets = [0, 0], sizes = [1, 8], strides = [1, 1]} : vector<4x8xf32> to vector<1x8xf32>
    %13 = vector.broadcast %11 : vector<8x1xf32> to vector<8x8xf32>
    %14 = vector.broadcast %12 : vector<1x8xf32> to vector<8x8xf32>
    %15 = arith.addf %13, %14 : vector<8x8xf32>
    %cst_10 = arith.constant 0.000000e+00 : f32
    %16 = vector.broadcast %cst_10 : f32 to vector<8x8xf32>
    %17 = arith.cmpf oge, %15, %16 : vector<8x8xf32>
    %cst_11 = arith.constant 2.000000e-01 : f32
    %18 = vector.broadcast %cst_11 : f32 to vector<8x8xf32>
    %19 = arith.mulf %18, %15 : vector<8x8xf32>
    %20 = arith.select %17, %15, %19 : vector<8x8xi1>, vector<8x8xf32>
    %21 = arith.addf %20, %6 : vector<8x8xf32>
    %cst_12 = arith.constant dense<0xFF800000> : vector<8xf32>
    %22 = vector.multi_reduction <maximumf>, %21, %cst_12 [1] : vector<8x8xf32> to vector<8xf32>
    %23 = vector.shape_cast %22 : vector<8xf32> to vector<8x1xf32>
    %24 = vector.broadcast %23 : vector<8x1xf32> to vector<8x8xf32>
    %25 = arith.subf %21, %24 : vector<8x8xf32>
    %26 = math.exp %25 : vector<8x8xf32>
    %cst_13 = arith.constant dense<0.000000e+00> : vector<8xf32>
    %27 = vector.multi_reduction <add>, %26, %cst_13 [1] : vector<8x8xf32> to vector<8xf32>
    %28 = vector.shape_cast %27 : vector<8xf32> to vector<8x1xf32>
    %29 = tpu.reciprocal %28 {approx = true} : vector<8x1xf32> -> vector<8x1xf32>
    %30 = vector.broadcast %29 : vector<8x1xf32> to vector<8x8xf32>
    %31 = arith.mulf %26, %30 : vector<8x8xf32>
    %c0_14 = arith.constant 0 : index
    %c0_15 = arith.constant 0 : index
    %c0_16 = arith.constant 0 : index
    %32 = vector.load %arg10[%c0_14, %c0_15, %c0_16] : memref<4x8x8xf32, #tpu.memory_space<vmem>>, vector<1x8x8xf32>
    %33 = vector.shape_cast %32 : vector<1x8x8xf32> to vector<8x8xf32>
    %34 = vector.shape_cast %31 : vector<8x8xf32> to vector<1x8x8xf32>
    tpu.vector_store %arg10[%c0_14, %c0_15, %c0_16], %34 {strides = array<i32>} : memref<4x8x8xf32, #tpu.memory_space<vmem>>, vector<1x8x8xf32>,
    %35 = vector.extract_strided_slice %7 {offsets = [0, 0], sizes = [8, 32], strides = [1, 1]} : vector<8x128xf32> to vector<8x32xf32>
    %cst_17 = arith.constant dense<0.000000e+00> : vector<8x32xf32>
    %36 = tpu.matmul %31, %35, %cst_17 {dimension_numbers = #tpu.dot_dimension_numbers<[1], [0], [0], [1], [0, 0, 1, 1], [], []>} : vector<8x8xf32>, vector<8x32xf32>, vector<8x32xf32> -> vector<8x32xf32>
    %37 = arith.addf %10, %36 : vector<8x32xf32>
    %38 = vector.extract_strided_slice %9 {offsets = [0, 1], sizes = [8, 1], strides = [1, 1]} : vector<8x4xf32> to vector<8x1xf32>
    %39 = vector.extract_strided_slice %8 {offsets = [1, 0], sizes = [1, 8], strides = [1, 1]} : vector<4x8xf32> to vector<1x8xf32>
    %40 = vector.broadcast %38 : vector<8x1xf32> to vector<8x8xf32>
    %41 = vector.broadcast %39 : vector<1x8xf32> to vector<8x8xf32>
    %42 = arith.addf %40, %41 : vector<8x8xf32>
    %cst_18 = arith.constant 0.000000e+00 : f32
    %43 = vector.broadcast %cst_18 : f32 to vector<8x8xf32>
    %44 = arith.cmpf oge, %42, %43 : vector<8x8xf32>
    %cst_19 = arith.constant 2.000000e-01 : f32
    %45 = vector.broadcast %cst_19 : f32 to vector<8x8xf32>
    %46 = arith.mulf %45, %42 : vector<8x8xf32>
    %47 = arith.select %44, %42, %46 : vector<8x8xi1>, vector<8x8xf32>
    %48 = arith.addf %47, %6 : vector<8x8xf32>
    %cst_20 = arith.constant dense<0xFF800000> : vector<8xf32>
    %49 = vector.multi_reduction <maximumf>, %48, %cst_20 [1] : vector<8x8xf32> to vector<8xf32>
    %50 = vector.shape_cast %49 : vector<8xf32> to vector<8x1xf32>
    %51 = vector.broadcast %50 : vector<8x1xf32> to vector<8x8xf32>
    %52 = arith.subf %48, %51 : vector<8x8xf32>
    %53 = math.exp %52 : vector<8x8xf32>
    %cst_21 = arith.constant dense<0.000000e+00> : vector<8xf32>
    %54 = vector.multi_reduction <add>, %53, %cst_21 [1] : vector<8x8xf32> to vector<8xf32>
    %55 = vector.shape_cast %54 : vector<8xf32> to vector<8x1xf32>
    %56 = tpu.reciprocal %55 {approx = true} : vector<8x1xf32> -> vector<8x1xf32>
    %57 = vector.broadcast %56 : vector<8x1xf32> to vector<8x8xf32>
    %58 = arith.mulf %53, %57 : vector<8x8xf32>
    %c1 = arith.constant 1 : index
    %c0_22 = arith.constant 0 : index
    %c0_23 = arith.constant 0 : index
    %59 = vector.load %arg10[%c1, %c0_22, %c0_23] : memref<4x8x8xf32, #tpu.memory_space<vmem>>, vector<1x8x8xf32>
    %60 = vector.shape_cast %59 : vector<1x8x8xf32> to vector<8x8xf32>
    %61 = vector.shape_cast %58 : vector<8x8xf32> to vector<1x8x8xf32>
    tpu.vector_store %arg10[%c1, %c0_22, %c0_23], %61 {strides = array<i32>} : memref<4x8x8xf32, #tpu.memory_space<vmem>>, vector<1x8x8xf32>,
    %62 = vector.extract_strided_slice %7 {offsets = [0, 32], sizes = [8, 32], strides = [1, 1]} : vector<8x128xf32> to vector<8x32xf32>
    %cst_24 = arith.constant dense<0.000000e+00> : vector<8x32xf32>
    %63 = tpu.matmul %58, %62, %cst_24 {dimension_numbers = #tpu.dot_dimension_numbers<[1], [0], [0], [1], [0, 0, 1, 1], [], []>} : vector<8x8xf32>, vector<8x32xf32>, vector<8x32xf32> -> vector<8x32xf32>
    %64 = arith.addf %37, %63 : vector<8x32xf32>
    %65 = vector.extract_strided_slice %9 {offsets = [0, 2], sizes = [8, 1], strides = [1, 1]} : vector<8x4xf32> to vector<8x1xf32>
    %66 = vector.extract_strided_slice %8 {offsets = [2, 0], sizes = [1, 8], strides = [1, 1]} : vector<4x8xf32> to vector<1x8xf32>
    %67 = vector.broadcast %65 : vector<8x1xf32> to vector<8x8xf32>
    %68 = vector.broadcast %66 : vector<1x8xf32> to vector<8x8xf32>
    %69 = arith.addf %67, %68 : vector<8x8xf32>
    %cst_25 = arith.constant 0.000000e+00 : f32
    %70 = vector.broadcast %cst_25 : f32 to vector<8x8xf32>
    %71 = arith.cmpf oge, %69, %70 : vector<8x8xf32>
    %cst_26 = arith.constant 2.000000e-01 : f32
    %72 = vector.broadcast %cst_26 : f32 to vector<8x8xf32>
    %73 = arith.mulf %72, %69 : vector<8x8xf32>
    %74 = arith.select %71, %69, %73 : vector<8x8xi1>, vector<8x8xf32>
    %75 = arith.addf %74, %6 : vector<8x8xf32>
    %cst_27 = arith.constant dense<0xFF800000> : vector<8xf32>
    %76 = vector.multi_reduction <maximumf>, %75, %cst_27 [1] : vector<8x8xf32> to vector<8xf32>
    %77 = vector.shape_cast %76 : vector<8xf32> to vector<8x1xf32>
    %78 = vector.broadcast %77 : vector<8x1xf32> to vector<8x8xf32>
    %79 = arith.subf %75, %78 : vector<8x8xf32>
    %80 = math.exp %79 : vector<8x8xf32>
    %cst_28 = arith.constant dense<0.000000e+00> : vector<8xf32>
    %81 = vector.multi_reduction <add>, %80, %cst_28 [1] : vector<8x8xf32> to vector<8xf32>
    %82 = vector.shape_cast %81 : vector<8xf32> to vector<8x1xf32>
    %83 = tpu.reciprocal %82 {approx = true} : vector<8x1xf32> -> vector<8x1xf32>
    %84 = vector.broadcast %83 : vector<8x1xf32> to vector<8x8xf32>
    %85 = arith.mulf %80, %84 : vector<8x8xf32>
    %c2 = arith.constant 2 : index
    %c0_29 = arith.constant 0 : index
    %c0_30 = arith.constant 0 : index
    %86 = vector.load %arg10[%c2, %c0_29, %c0_30] : memref<4x8x8xf32, #tpu.memory_space<vmem>>, vector<1x8x8xf32>
    %87 = vector.shape_cast %86 : vector<1x8x8xf32> to vector<8x8xf32>
    %88 = vector.shape_cast %85 : vector<8x8xf32> to vector<1x8x8xf32>
    tpu.vector_store %arg10[%c2, %c0_29, %c0_30], %88 {strides = array<i32>} : memref<4x8x8xf32, #tpu.memory_space<vmem>>, vector<1x8x8xf32>,
    %89 = vector.extract_strided_slice %7 {offsets = [0, 64], sizes = [8, 32], strides = [1, 1]} : vector<8x128xf32> to vector<8x32xf32>
    %cst_31 = arith.constant dense<0.000000e+00> : vector<8x32xf32>
    %90 = tpu.matmul %85, %89, %cst_31 {dimension_numbers = #tpu.dot_dimension_numbers<[1], [0], [0], [1], [0, 0, 1, 1], [], []>} : vector<8x8xf32>, vector<8x32xf32>, vector<8x32xf32> -> vector<8x32xf32>
    %91 = arith.addf %64, %90 : vector<8x32xf32>
    %92 = vector.extract_strided_slice %9 {offsets = [0, 3], sizes = [8, 1], strides = [1, 1]} : vector<8x4xf32> to vector<8x1xf32>
    %93 = vector.extract_strided_slice %8 {offsets = [3, 0], sizes = [1, 8], strides = [1, 1]} : vector<4x8xf32> to vector<1x8xf32>
    %94 = vector.broadcast %92 : vector<8x1xf32> to vector<8x8xf32>
    %95 = vector.broadcast %93 : vector<1x8xf32> to vector<8x8xf32>
    %96 = arith.addf %94, %95 : vector<8x8xf32>
    %cst_32 = arith.constant 0.000000e+00 : f32
    %97 = vector.broadcast %cst_32 : f32 to vector<8x8xf32>
    %98 = arith.cmpf oge, %96, %97 : vector<8x8xf32>
    %cst_33 = arith.constant 2.000000e-01 : f32
    %99 = vector.broadcast %cst_33 : f32 to vector<8x8xf32>
    %100 = arith.mulf %99, %96 : vector<8x8xf32>
    %101 = arith.select %98, %96, %100 : vector<8x8xi1>, vector<8x8xf32>
    %102 = arith.addf %101, %6 : vector<8x8xf32>
    %cst_34 = arith.constant dense<0xFF800000> : vector<8xf32>
    %103 = vector.multi_reduction <maximumf>, %102, %cst_34 [1] : vector<8x8xf32> to vector<8xf32>
    %104 = vector.shape_cast %103 : vector<8xf32> to vector<8x1xf32>
    %105 = vector.broadcast %104 : vector<8x1xf32> to vector<8x8xf32>
    %106 = arith.subf %102, %105 : vector<8x8xf32>
    %107 = math.exp %106 : vector<8x8xf32>
    %cst_35 = arith.constant dense<0.000000e+00> : vector<8xf32>
    %108 = vector.multi_reduction <add>, %107, %cst_35 [1] : vector<8x8xf32> to vector<8xf32>
    %109 = vector.shape_cast %108 : vector<8xf32> to vector<8x1xf32>
    %110 = tpu.reciprocal %109 {approx = true} : vector<8x1xf32> -> vector<8x1xf32>
    %111 = vector.broadcast %110 : vector<8x1xf32> to vector<8x8xf32>
    %112 = arith.mulf %107, %111 : vector<8x8xf32>
    %c3 = arith.constant 3 : index
    %c0_36 = arith.constant 0 : index
    %c0_37 = arith.constant 0 : index
    %113 = vector.load %arg10[%c3, %c0_36, %c0_37] : memref<4x8x8xf32, #tpu.memory_space<vmem>>, vector<1x8x8xf32>
    %114 = vector.shape_cast %113 : vector<1x8x8xf32> to vector<8x8xf32>
    %115 = vector.shape_cast %112 : vector<8x8xf32> to vector<1x8x8xf32>
    tpu.vector_store %arg10[%c3, %c0_36, %c0_37], %115 {strides = array<i32>} : memref<4x8x8xf32, #tpu.memory_space<vmem>>, vector<1x8x8xf32>,
    %116 = vector.extract_strided_slice %7 {offsets = [0, 96], sizes = [8, 32], strides = [1, 1]} : vector<8x128xf32> to vector<8x32xf32>
    %cst_38 = arith.constant dense<0.000000e+00> : vector<8x32xf32>
    %117 = tpu.matmul %112, %116, %cst_38 {dimension_numbers = #tpu.dot_dimension_numbers<[1], [0], [0], [1], [0, 0, 1, 1], [], []>} : vector<8x8xf32>, vector<8x32xf32>, vector<8x32xf32> -> vector<8x32xf32>
    %118 = arith.addf %91, %117 : vector<8x32xf32>
    %cst_39 = arith.constant 2.500000e-01 : f32
    %119 = vector.broadcast %cst_39 : f32 to vector<8x32xf32>
    %120 = arith.mulf %118, %119 : vector<8x32xf32>
    %c0_40 = arith.constant 0 : index
    %c0_41 = arith.constant 0 : index
    %121 = vector.load %arg2[%c0_40, %c0_41] : memref<8x128xf32, #tpu.memory_space<vmem>>, vector<8x128xf32>
    %c0_42 = arith.constant 0 : index
    %c0_43 = arith.constant 0 : index
    %122 = vector.load %arg6[%c0_42, %c0_43] : memref<1x128xf32, #tpu.memory_space<vmem>>, vector<1x128xf32>
    %123 = vector.broadcast %122 : vector<1x128xf32> to vector<8x128xf32>
    %124 = arith.addf %121, %123 : vector<8x128xf32>
    %c0_44 = arith.constant 0 : index
    %c0_45 = arith.constant 0 : index
    %125 = vector.load %arg7[%c0_44, %c0_45] : memref<128x32xf32, #tpu.memory_space<vmem>>, vector<128x32xf32>
    %cst_46 = arith.constant dense<0.000000e+00> : vector<8x32xf32>
    %126 = tpu.matmul %124, %125, %cst_46 {dimension_numbers = #tpu.dot_dimension_numbers<[1], [0], [0], [1], [0, 0, 1, 1], [], []>} : vector<8x128xf32>, vector<128x32xf32>, vector<8x32xf32> -> vector<8x32xf32>
    %127 = arith.addf %120, %126 : vector<8x32xf32>
    %cst_47 = arith.constant 0.000000e+00 : f32
    %128 = vector.broadcast %cst_47 : f32 to vector<8x32xf32>
    %129 = arith.maximumf %127, %128 : vector<8x32xf32>
    %c0_48 = arith.constant 0 : index
    %c0_49 = arith.constant 0 : index
    %130 = vector.load %arg8[%c0_48, %c0_49] : memref<32x2xf32, #tpu.memory_space<vmem>>, vector<32x2xf32>
    %cst_50 = arith.constant dense<0.000000e+00> : vector<8x2xf32>
    %131 = tpu.matmul %129, %130, %cst_50 {dimension_numbers = #tpu.dot_dimension_numbers<[1], [0], [0], [1], [0, 0, 1, 1], [], []>} : vector<8x32xf32>, vector<32x2xf32>, vector<8x2xf32> -> vector<8x2xf32>
    %c0_51 = arith.constant 0 : index
    %c0_52 = arith.constant 0 : index
    %132 = vector.load %arg9[%c0_51, %c0_52] : memref<1x2xf32, #tpu.memory_space<vmem>>, vector<1x2xf32>
    %133 = vector.broadcast %132 : vector<1x2xf32> to vector<8x2xf32>
    %134 = arith.addf %131, %133 : vector<8x2xf32>
    %cst_53 = arith.constant dense<0xFF800000> : vector<8xf32>
    %135 = vector.multi_reduction <maximumf>, %134, %cst_53 [1] : vector<8x2xf32> to vector<8xf32>
    %136 = vector.shape_cast %135 : vector<8xf32> to vector<8x1xf32>
    %137 = vector.broadcast %136 : vector<8x1xf32> to vector<8x2xf32>
    %138 = arith.subf %134, %137 : vector<8x2xf32>
    %139 = math.exp %138 : vector<8x2xf32>
    %cst_54 = arith.constant dense<0.000000e+00> : vector<8xf32>
    %140 = vector.multi_reduction <add>, %139, %cst_54 [1] : vector<8x2xf32> to vector<8xf32>
    %141 = vector.shape_cast %140 : vector<8xf32> to vector<8x1xf32>
    %142 = vector.broadcast %141 : vector<8x1xf32> to vector<8x2xf32>
    %143 = arith.divf %139, %142 : vector<8x2xf32>
    %c0_55 = arith.constant 0 : index
    %c0_56 = arith.constant 0 : index
    %144 = vector.load %arg11[%c0_55, %c0_56] : memref<8x2xf32, #tpu.memory_space<vmem>>, vector<8x2xf32>
    tpu.vector_store %arg11[%c0_55, %c0_56], %143 {strides = array<i32>} : memref<8x2xf32, #tpu.memory_space<vmem>>, vector<8x2xf32>,
    return
  }
  func.func @transform_0(%arg0: i32) -> (i32, i32) {
    %c0_i32 = arith.constant 0 : i32
    %c0_i32_0 = arith.constant 0 : i32
    return %arg0, %c0_i32 : i32, i32
  }
  func.func @transform_1(%arg0: i32) -> (i32, i32) {
    %c0_i32 = arith.constant 0 : i32
    %c0_i32_0 = arith.constant 0 : i32
    return %arg0, %c0_i32 : i32, i32
  }
  func.func @transform_2(%arg0: i32) -> (i32, i32) {
    %c0_i32 = arith.constant 0 : i32
    %c0_i32_0 = arith.constant 0 : i32
    return %arg0, %c0_i32 : i32, i32
  }
  func.func @transform_3(%arg0: i32) -> (i32, i32) {
    %c0_i32 = arith.constant 0 : i32
    %c0_i32_0 = arith.constant 0 : i32
    %c0_i32_1 = arith.constant 0 : i32
    return %c0_i32, %c0_i32_0 : i32, i32
  }
  func.func @transform_4(%arg0: i32) -> (i32, i32) {
    %c0_i32 = arith.constant 0 : i32
    %c0_i32_0 = arith.constant 0 : i32
    %c0_i32_1 = arith.constant 0 : i32
    return %c0_i32, %c0_i32_0 : i32, i32
  }
  func.func @transform_5(%arg0: i32) -> (i32, i32) {
    %c0_i32 = arith.constant 0 : i32
    %c0_i32_0 = arith.constant 0 : i32
    %c0_i32_1 = arith.constant 0 : i32
    return %c0_i32, %c0_i32_0 : i32, i32
  }
  func.func @transform_6(%arg0: i32) -> (i32, i32) {
    %c0_i32 = arith.constant 0 : i32
    %c0_i32_0 = arith.constant 0 : i32
    %c0_i32_1 = arith.constant 0 : i32
    return %c0_i32, %c0_i32_0 : i32, i32
  }
  func.func @transform_7(%arg0: i32) -> (i32, i32) {
    %c0_i32 = arith.constant 0 : i32
    %c0_i32_0 = arith.constant 0 : i32
    %c0_i32_1 = arith.constant 0 : i32
    return %c0_i32, %c0_i32_0 : i32, i32
  }
  func.func @transform_8(%arg0: i32) -> (i32, i32) {
    %c0_i32 = arith.constant 0 : i32
    %c0_i32_0 = arith.constant 0 : i32
    %c0_i32_1 = arith.constant 0 : i32
    return %c0_i32, %c0_i32_0 : i32, i32
  }
  func.func @transform_9(%arg0: i32) -> (i32, i32, i32) {
    %c0_i32 = arith.constant 0 : i32
    %c0_i32_0 = arith.constant 0 : i32
    %c0_i32_1 = arith.constant 0 : i32
    return %c0_i32, %arg0, %c0_i32_0 : i32, i32, i32
  }
  func.func @transform_10(%arg0: i32) -> (i32, i32) {
    %c0_i32 = arith.constant 0 : i32
    %c0_i32_0 = arith.constant 0 : i32
    return %arg0, %c0_i32 : i32, i32
  }
}

</mosaic_0001>

<llo_original>
// kernel: gnn_forward.3
$region0: #{gnn_forward.3}
  #allocation0 [shape = 'u32[]', space=smem, size = 0x4, offset = 0x4, fixed_abs, tag = 'smem constant byte address 0x4 - core index']
  #allocation1 [shape = 'u32[144,128]{1,0:T(1,128)}', space=vmem, size = 0x12000, scoped, tag = 'internal scratch']
  %s0 = inlined_call_operand.vmem [shape: s8[8,8], index: 0, kind: input, shape index: {}]
  %s1 = inlined_call_operand.vmem [shape: f32[8,128], index: 1, kind: input, shape index: {}]
  %s2 = inlined_call_operand.vmem [shape: f32[8,4], index: 2, kind: input, shape index: {}]
  %s3 = inlined_call_operand.vmem [shape: f32[8,128], index: 3, kind: input, shape index: {}]
  %s4 = inlined_call_operand.vmem [shape: f32[4,8], index: 4, kind: input, shape index: {}]
  %s5 = inlined_call_operand.vmem [shape: f32[1,128], index: 5, kind: input, shape index: {}]
  %s6 = inlined_call_operand.vmem [shape: f32[128,32], index: 6, kind: input, shape index: {}]
  %s7 = inlined_call_operand.vmem [shape: f32[32,2], index: 7, kind: input, shape index: {}]
  %s8 = inlined_call_operand.vmem [shape: f32[1,2], index: 8, kind: input, shape index: {}]
  %s9 = inlined_call_operand.hbm [shape: f32[4,8,8], index: 9, kind: output, shape index: {0}]
  %s10 = inlined_call_operand.vmem [shape: f32[8,2], index: 10, kind: output, shape index: {1}]
  %11 = xla_tuple %s9, %s10
  %s12 = sld [smem:[#allocation0]]
  $region54: #{gnn_forward.3} parent=0
    _
  %s14 = ssub.s32 1, %s12
  %s15 = scalar_select 0, %s14, %s12
  $region1: #{gnn_forward.3} parent=0
    #allocation2 [shape = 'u8[16384]{0}', space=vmem, size = 0x4000, scoped, tag = 'output window, operand 0, single buffered']
    #allocation3 [shape = 's32[1]{0}', space=sflag, size = 0x4, scoped, tag = 'scoped memory for gnn_forward.3']
    %16 = vsyncpa [#allocation3], 0
    // Predicated region
    $region2: #{gnn_forward.3} parent=1 // pred_check
      _
    $region3: #{gnn_forward.3} parent=1 // pred_check_branch
      %18 = sbr.rel (0) target = $region5
    $region4: #{gnn_forward.3} parent=1 // pred_region
      _
    $region5: #{gnn_forward.3} parent=1 // pred_fallthru
      _
    // Predicated region
    $region6: #{gnn_forward.3} parent=1 // pred_check
      _
    $region7: #{gnn_forward.3} parent=1 // pred_check_branch
      %20 = sbr.rel (0) target = $region9
    $region8: #{gnn_forward.3} parent=1 // pred_region
      _
    $region9: #{gnn_forward.3} parent=1 // pred_fallthru
      _
    // Predicated region
    $region10: #{gnn_forward.3} parent=1 // pred_check
      _
    $region11: #{gnn_forward.3} parent=1 // pred_check_branch
      %22 = sbr.rel (0) target = $region13
    $region12: #{gnn_forward.3} parent=1 // pred_region
      _
    $region13: #{gnn_forward.3} parent=1 // pred_fallthru
      _
    // Predicated region
    $region14: #{gnn_forward.3} parent=1 // pred_check
      _
    $region15: #{gnn_forward.3} parent=1 // pred_check_branch
      %24 = sbr.rel (0) target = $region17
    $region16: #{gnn_forward.3} parent=1 // pred_region
      _
    $region17: #{gnn_forward.3} parent=1 // pred_fallthru
      _
    // Predicated region
    $region18: #{gnn_forward.3} parent=1 // pred_check
      _
    $region19: #{gnn_forward.3} parent=1 // pred_check_branch
      %26 = sbr.rel (0) target = $region21
    $region20: #{gnn_forward.3} parent=1 // pred_region
      _
    $region21: #{gnn_forward.3} parent=1 // pred_fallthru
      _
    // Predicated region
    $region22: #{gnn_forward.3} parent=1 // pred_check
      _
    $region23: #{gnn_forward.3} parent=1 // pred_check_branch
      %28 = sbr.rel (0) target = $region25
    $region24: #{gnn_forward.3} parent=1 // pred_region
      _
    $region25: #{gnn_forward.3} parent=1 // pred_fallthru
      _
    // Predicated region
    $region26: #{gnn_forward.3} parent=1 // pred_check
      _
    $region27: #{gnn_forward.3} parent=1 // pred_check_branch
      %30 = sbr.rel (0) target = $region29
    $region28: #{gnn_forward.3} parent=1 // pred_region
      _
    $region29: #{gnn_forward.3} parent=1 // pred_fallthru
      _
    // Predicated region
    $region30: #{gnn_forward.3} parent=1 // pred_check
      _
    $region31: #{gnn_forward.3} parent=1 // pred_check_branch
      %32 = sbr.rel (0) target = $region33
    $region32: #{gnn_forward.3} parent=1 // pred_region
      _
    $region33: #{gnn_forward.3} parent=1 // pred_fallthru
      _
    // Predicated region
    $region34: #{gnn_forward.3} parent=1 // pred_check
      _
    $region35: #{gnn_forward.3} parent=1 // pred_check_branch
      %34 = sbr.rel (0) target = $region37
    $region36: #{gnn_forward.3} parent=1 // pred_region
      _
    $region37: #{gnn_forward.3} parent=1 // pred_fallthru
      _
    %v35 = vld [vmem:[%s0] sm:$0x3]
    %v36 = vunpack.c.0.s8 %v35
    %v37 = vcvt.s32.f32 %v36
    %vm38 = vcmp.ne.f32.partialorder %v37, 0.0
    %v39 = vsel %vm38, 0.0, -1e+30
    %v40 = vld [vmem:[%s3] sm:$0xff]
    %v41 = vld [vmem:[%s4] sm:$0xf]
    %v42 = vld [vmem:[%s2] sm:$0xff]
    %44 = vset.pattern.permute.xlu0 0
    %45 = vperm.xlu0 %44, %v42
    %v46 = vpop.permute.xlu0 %45
    %v48 = vlaneseq
    %v49 = vshrl.u32 %v48, 7
    %v50 = vsub.s32 0, %v49
    %v51 = vrot.slane %v41, %v50
    %v52 = vadd.f32 %v46, %v51
    %vm53 = vcmp.ge.f32.partialorder %v52, 0.0
    %v54 = vmul.f32 %v52, 0.2
    %v55 = vsel %vm53, %v52, %v54
    %v56 = vadd.f32 %v55, %v39
    %vm57 = vcmask 64512
    %v58 = vsel %vm57, %v56, -inf
    %59 = vmax.xlane.f32.xlu0 %v58
    %v60 = vpop.xlane.xlu0 %59
    %v61 = vsub.f32 %v56, %v60
    %v62 = vmul.f32 %v61, 1.442695
    %v63 = vpow.pop %v62
    %v64 = vsel %vm57, %v63, 0.0
    %65 = vadd.xlane.f32.xlu0 %v64
    %v66 = vpop.xlane.xlu0 %65
    %v67 = vrcp.pop %v66
    %v68 = vmul.f32 %v63, %v67
    %69 = vst.msk [vmem:[#allocation2] sm:$0xff] %vm57, %v68
    %70 = vset.pattern.permute.xlu0 1
    %71 = vperm.xlu0 %70, %v42
    %v72 = vpop.permute.xlu0 %71
    %v74 = vlaneseq
    %v75 = vshrl.u32 %v74, 7
    %v76 = vsub.s32 1, %v75
    %v77 = vrot.slane %v41, %v76
    %v78 = vadd.f32 %v72, %v77
    %vm79 = vcmp.ge.f32.partialorder %v78, 0.0
    %v80 = vmul.f32 %v78, 0.2
    %v81 = vsel %vm79, %v78, %v80
    %v82 = vadd.f32 %v81, %v39
    %v83 = vsel %vm57, %v82, -inf
    %84 = vmax.xlane.f32.xlu0 %v83
    %v85 = vpop.xlane.xlu0 %84
    %v86 = vsub.f32 %v82, %v85
    %v87 = vmul.f32 %v86, 1.442695
    %v88 = vpow.pop %v87
    %v89 = vsel %vm57, %v88, 0.0
    %90 = vadd.xlane.f32.xlu0 %v89
    %v91 = vpop.xlane.xlu0 %90
    %v92 = vrcp.pop %v91
    %v93 = vmul.f32 %v88, %v92
    %s94 = scalar_lea.vmem [#allocation2], 8
    %95 = vst.msk [vmem:[%s94] sm:$0xff] %vm57, %v93
    %97 = vrot.lane.b32.xlu0 %v40, 96
    %v98 = vpop.permute.xlu0 %97
    %v101 = vsel %vm57, %v93, 0
    %103 = vmatprep.subr.mxu0 0.0
    %104 = vmatpush1.msra.mxu0 %v98
    %105 = vmatprep.subr.mxu0 0.0
    %106 = vmatpush1.msra.mxu0 0.0
    %107 = vmatprep.subr.mxu0 0.0
    %108 = vmatpush1.msra.mxu0 0.0
    %109 = vmatprep.subr.mxu0 0.0
    %110 = vmatpush1.msra.mxu0 0.0
    %111 = vmatprep.subr.mxu0 0.0
    %112 = vmatpush1.msra.mxu0 0.0
    %113 = vmatprep.subr.mxu0 0.0
    %114 = vmatpush1.msra.mxu0 0.0
    %115 = vmatprep.subr.mxu0 0.0
    %116 = vmatpush1.msra.mxu0 0.0
    %117 = vmatprep.subr.mxu0 0.0
    %118 = vmatpush1.msra.mxu0 0.0
    %119 = vmatprep.subr.mxu0 0.0
    %120 = vmatpush1.msra.mxu0 0.0
    %121 = vmatprep.subr.mxu0 0.0
    %122 = vmatpush1.msra.mxu0 0.0
    %123 = vmatprep.subr.mxu0 0.0
    %124 = vmatpush1.msra.mxu0 0.0
    %125 = vmatprep.subr.mxu0 0.0
    %126 = vmatpush1.msra.mxu0 0.0
    %127 = vmatprep.subr.mxu0 0.0
    %128 = vmatpush1.msra.mxu0 0.0
    %129 = vmatprep.subr.mxu0 0.0
    %130 = vmatpush1.msra.mxu0 0.0
    %131 = vmatprep.subr.mxu0 0.0
    %132 = vmatpush1.msra.mxu0 0.0
    %133 = vmatprep.subr.mxu0 0.0
    %134 = vmatpush1.msra.mxu0 0.0
    %135 = vmatprep.subr.mxu0 0.0
    %136 = vmatpush1.msra.mxu0 0.0
    %137 = vmatprep.subr.mxu0 0.0
    %138 = vmatpush1.msra.mxu0 0.0
    %139 = vmatprep.subr.mxu0 0.0
    %140 = vmatpush1.msra.mxu0 0.0
    %141 = vmatprep.subr.mxu0 0.0
    %142 = vmatpush1.msra.mxu0 0.0
    %143 = vmatprep.subr.mxu0 0.0
    %144 = vmatpush1.msra.mxu0 0.0
    %145 = vmatprep.subr.mxu0 0.0
    %146 = vmatpush1.msra.mxu0 0.0
    %147 = vmatprep.subr.mxu0 0.0
    %148 = vmatpush1.msra.mxu0 0.0
    %149 = vmatprep.subr.mxu0 0.0
    %150 = vmatpush1.msra.mxu0 0.0
    %151 = vmatprep.subr.mxu0 0.0
    %152 = vmatpush1.msra.mxu0 0.0
    %153 = vmatprep.subr.mxu0 0.0
    %154 = vmatpush1.msra.mxu0 0.0
    %155 = vmatprep.subr.mxu0 0.0
    %156 = vmatpush1.msra.mxu0 0.0
    %157 = vmatprep.subr.mxu0 0.0
    %158 = vmatpush1.msra.mxu0 0.0
    %159 = vmatprep.subr.mxu0 0.0
    %160 = vmatpush1.msra.mxu0 0.0
    %161 = vmatprep.subr.mxu0 0.0
    %162 = vmatpush1.msra.mxu0 0.0
    %163 = vmatprep.subr.mxu0 0.0
    %164 = vmatpush1.msra.mxu0 0.0
    %165 = vmatprep.subr.mxu0 0.0
    %166 = vmatpush1.msra.mxu0 0.0
    %167 = vmatprep.mubr.f32.mxu0 0.0
    %168 = vmatmul.mubr.f32.gmra.mrb[0].mxu0 %v101
    %v169 = vpop.f32.mrb[0].mxu0
    %v170 = vadd.f32 0.0, %v169
    %v171 = vpop.f32.mrb[0].mxu0
    %172 = vdwg.mxu0
    %v174 = vsel %vm57, %v68, 0
    %176 = vmatprep.subr.mxu0 0.0
    %177 = vmatpush1.msra.mxu0 %v40
    %178 = vmatprep.subr.mxu0 0.0
    %179 = vmatpush1.msra.mxu0 0.0
    %180 = vmatprep.subr.mxu0 0.0
    %181 = vmatpush1.msra.mxu0 0.0
    %182 = vmatprep.subr.mxu0 0.0
    %183 = vmatpush1.msra.mxu0 0.0
    %184 = vmatprep.subr.mxu0 0.0
    %185 = vmatpush1.msra.mxu0 0.0
    %186 = vmatprep.subr.mxu0 0.0
    %187 = vmatpush1.msra.mxu0 0.0
    %188 = vmatprep.subr.mxu0 0.0
    %189 = vmatpush1.msra.mxu0 0.0
    %190 = vmatprep.subr.mxu0 0.0
    %191 = vmatpush1.msra.mxu0 0.0
    %192 = vmatprep.subr.mxu0 0.0
    %193 = vmatpush1.msra.mxu0 0.0
    %194 = vmatprep.subr.mxu0 0.0
    %195 = vmatpush1.msra.mxu0 0.0
    %196 = vmatprep.subr.mxu0 0.0
    %197 = vmatpush1.msra.mxu0 0.0
    %198 = vmatprep.subr.mxu0 0.0
    %199 = vmatpush1.msra.mxu0 0.0
    %200 = vmatprep.subr.mxu0 0.0
    %201 = vmatpush1.msra.mxu0 0.0
    %202 = vmatprep.subr.mxu0 0.0
    %203 = vmatpush1.msra.mxu0 0.0
    %204 = vmatprep.subr.mxu0 0.0
    %205 = vmatpush1.msra.mxu0 0.0
    %206 = vmatprep.subr.mxu0 0.0
    %207 = vmatpush1.msra.mxu0 0.0
    %208 = vmatprep.subr.mxu0 0.0
    %209 = vmatpush1.msra.mxu0 0.0
    %210 = vmatprep.subr.mxu0 0.0
    %211 = vmatpush1.msra.mxu0 0.0
    %212 = vmatprep.subr.mxu0 0.0
    %213 = vmatpush1.msra.mxu0 0.0
    %214 = vmatprep.subr.mxu0 0.0
    %215 = vmatpush1.msra.mxu0 0.0
    %216 = vmatprep.subr.mxu0 0.0
    %217 = vmatpush1.msra.mxu0 0.0
    %218 = vmatprep.subr.mxu0 0.0
    %219 = vmatpush1.msra.mxu0 0.0
    %220 = vmatprep.subr.mxu0 0.0
    %221 = vmatpush1.msra.mxu0 0.0
    %222 = vmatprep.subr.mxu0 0.0
    %223 = vmatpush1.msra.mxu0 0.0
    %224 = vmatprep.subr.mxu0 0.0
    %225 = vmatpush1.msra.mxu0 0.0
    %226 = vmatprep.subr.mxu0 0.0
    %227 = vmatpush1.msra.mxu0 0.0
    %228 = vmatprep.subr.mxu0 0.0
    %229 = vmatpush1.msra.mxu0 0.0
    %230 = vmatprep.subr.mxu0 0.0
    %231 = vmatpush1.msra.mxu0 0.0
    %232 = vmatprep.subr.mxu0 0.0
    %233 = vmatpush1.msra.mxu0 0.0
    %234 = vmatprep.subr.mxu0 0.0
    %235 = vmatpush1.msra.mxu0 0.0
    %236 = vmatprep.subr.mxu0 0.0
    %237 = vmatpush1.msra.mxu0 0.0
    %238 = vmatprep.subr.mxu0 0.0
    %239 = vmatpush1.msra.mxu0 0.0
    %240 = vmatprep.mubr.f32.mxu0 0.0
    %241 = vmatmul.mubr.f32.gmra.mrb[0].mxu0 %v174
    %v242 = vpop.f32.mrb[0].mxu0
    %v243 = vadd.f32 %v170, %v242
    %v244 = vpop.f32.mrb[0].mxu0
    %245 = vdwg.mxu0
    %246 = vset.pattern.permute.xlu0 2
    %247 = vperm.xlu0 %246, %v42
    %v248 = vpop.permute.xlu0 %247
    %v250 = vlaneseq
    %v251 = vshrl.u32 %v250, 7
    %v252 = vsub.s32 2, %v251
    %v253 = vrot.slane %v41, %v252
    %v254 = vadd.f32 %v248, %v253
    %vm255 = vcmp.ge.f32.partialorder %v254, 0.0
    %v256 = vmul.f32 %v254, 0.2
    %v257 = vsel %vm255, %v254, %v256
    %v258 = vadd.f32 %v257, %v39
    %v259 = vsel %vm57, %v258, -inf
    %260 = vmax.xlane.f32.xlu0 %v259
    %v261 = vpop.xlane.xlu0 %260
    %v262 = vsub.f32 %v258, %v261
    %v263 = vmul.f32 %v262, 1.442695
    %v264 = vpow.pop %v263
    %v265 = vsel %vm57, %v264, 0.0
    %266 = vadd.xlane.f32.xlu0 %v265
    %v267 = vpop.xlane.xlu0 %266
    %v268 = vrcp.pop %v267
    %v269 = vmul.f32 %v264, %v268
    %s270 = scalar_lea.vmem [#allocation2], 16
    %271 = vst.msk [vmem:[%s270] sm:$0xff] %vm57, %v269
    %272 = vrot.lane.b32.xlu0 %v40, 64
    %v273 = vpop.permute.xlu0 %272
    %v276 = vsel %vm57, %v269, 0
    %278 = vmatprep.subr.mxu0 0.0
    %279 = vmatpush1.msra.mxu0 %v273
    %280 = vmatprep.subr.mxu0 0.0
    %281 = vmatpush1.msra.mxu0 0.0
    %282 = vmatprep.subr.mxu0 0.0
    %283 = vmatpush1.msra.mxu0 0.0
    %284 = vmatprep.subr.mxu0 0.0
    %285 = vmatpush1.msra.mxu0 0.0
    %286 = vmatprep.subr.mxu0 0.0
    %287 = vmatpush1.msra.mxu0 0.0
    %288 = vmatprep.subr.mxu0 0.0
    %289 = vmatpush1.msra.mxu0 0.0
    %290 = vmatprep.subr.mxu0 0.0
    %291 = vmatpush1.msra.mxu0 0.0
    %292 = vmatprep.subr.mxu0 0.0
    %293 = vmatpush1.msra.mxu0 0.0
    %294 = vmatprep.subr.mxu0 0.0
    %295 = vmatpush1.msra.mxu0 0.0
    %296 = vmatprep.subr.mxu0 0.0
    %297 = vmatpush1.msra.mxu0 0.0
    %298 = vmatprep.subr.mxu0 0.0
    %299 = vmatpush1.msra.mxu0 0.0
    %300 = vmatprep.subr.mxu0 0.0
    %301 = vmatpush1.msra.mxu0 0.0
    %302 = vmatprep.subr.mxu0 0.0
    %303 = vmatpush1.msra.mxu0 0.0
    %304 = vmatprep.subr.mxu0 0.0
    %305 = vmatpush1.msra.mxu0 0.0
    %306 = vmatprep.subr.mxu0 0.0
    %307 = vmatpush1.msra.mxu0 0.0
    %308 = vmatprep.subr.mxu0 0.0
    %309 = vmatpush1.msra.mxu0 0.0
    %310 = vmatprep.subr.mxu0 0.0
    %311 = vmatpush1.msra.mxu0 0.0
    %312 = vmatprep.subr.mxu0 0.0
    %313 = vmatpush1.msra.mxu0 0.0
    %314 = vmatprep.subr.mxu0 0.0
    %315 = vmatpush1.msra.mxu0 0.0
    %316 = vmatprep.subr.mxu0 0.0
    %317 = vmatpush1.msra.mxu0 0.0
    %318 = vmatprep.subr.mxu0 0.0
    %319 = vmatpush1.msra.mxu0 0.0
    %320 = vmatprep.subr.mxu0 0.0
    %321 = vmatpush1.msra.mxu0 0.0
    %322 = vmatprep.subr.mxu0 0.0
    %323 = vmatpush1.msra.mxu0 0.0
    %324 = vmatprep.subr.mxu0 0.0
    %325 = vmatpush1.msra.mxu0 0.0
    %326 = vmatprep.subr.mxu0 0.0
    %327 = vmatpush1.msra.mxu0 0.0
    %328 = vmatprep.subr.mxu0 0.0
    %329 = vmatpush1.msra.mxu0 0.0
    %330 = vmatprep.subr.mxu0 0.0
    %331 = vmatpush1.msra.mxu0 0.0
    %332 = vmatprep.subr.mxu0 0.0
    %333 = vmatpush1.msra.mxu0 0.0
    %334 = vmatprep.subr.mxu0 0.0
    %335 = vmatpush1.msra.mxu0 0.0
    %336 = vmatprep.subr.mxu0 0.0
    %337 = vmatpush1.msra.mxu0 0.0
    %338 = vmatprep.subr.mxu0 0.0
    %339 = vmatpush1.msra.mxu0 0.0
    %340 = vmatprep.subr.mxu0 0.0
    %341 = vmatpush1.msra.mxu0 0.0
    %342 = vmatprep.mubr.f32.mxu0 0.0
    %343 = vmatmul.mubr.f32.gmra.mrb[0].mxu0 %v276
    %v344 = vpop.f32.mrb[0].mxu0
    %v345 = vadd.f32 0.0, %v344
    %v346 = vpop.f32.mrb[0].mxu0
    %347 = vdwg.mxu0
    %v348 = vadd.f32 %v243, %v345
    %349 = vset.pattern.permute.xlu0 3
    %350 = vperm.xlu0 %349, %v42
    %v351 = vpop.permute.xlu0 %350
    %v353 = vlaneseq
    %v354 = vshrl.u32 %v353, 7
    %v355 = vsub.s32 3, %v354
    %v356 = vrot.slane %v41, %v355
    %v357 = vadd.f32 %v351, %v356
    %vm358 = vcmp.ge.f32.partialorder %v357, 0.0
    %v359 = vmul.f32 %v357, 0.2
    %v360 = vsel %vm358, %v357, %v359
    %v361 = vadd.f32 %v360, %v39
    %v362 = vsel %vm57, %v361, -inf
    %363 = vmax.xlane.f32.xlu0 %v362
    %v364 = vpop.xlane.xlu0 %363
    %v365 = vsub.f32 %v361, %v364
    %v366 = vmul.f32 %v365, 1.442695
    %v367 = vpow.pop %v366
    %v368 = vsel %vm57, %v367, 0.0
    %369 = vadd.xlane.f32.xlu0 %v368
    %v370 = vpop.xlane.xlu0 %369
    %v371 = vrcp.pop %v370
    %v372 = vmul.f32 %v367, %v371
    %s373 = scalar_lea.vmem [#allocation2], 24
    %374 = vst.msk [vmem:[%s373] sm:$0xff] %vm57, %v372
    %375 = vrot.lane.b32.xlu0 %v40, 32
    %v376 = vpop.permute.xlu0 %375
    %v379 = vsel %vm57, %v372, 0
    %381 = vmatprep.subr.mxu0 0.0
    %382 = vmatpush1.msra.mxu0 %v376
    %383 = vmatprep.subr.mxu0 0.0
    %384 = vmatpush1.msra.mxu0 0.0
    %385 = vmatprep.subr.mxu0 0.0
    %386 = vmatpush1.msra.mxu0 0.0
    %387 = vmatprep.subr.mxu0 0.0
    %388 = vmatpush1.msra.mxu0 0.0
    %389 = vmatprep.subr.mxu0 0.0
    %390 = vmatpush1.msra.mxu0 0.0
    %391 = vmatprep.subr.mxu0 0.0
    %392 = vmatpush1.msra.mxu0 0.0
    %393 = vmatprep.subr.mxu0 0.0
    %394 = vmatpush1.msra.mxu0 0.0
    %395 = vmatprep.subr.mxu0 0.0
    %396 = vmatpush1.msra.mxu0 0.0
    %397 = vmatprep.subr.mxu0 0.0
    %398 = vmatpush1.msra.mxu0 0.0
    %399 = vmatprep.subr.mxu0 0.0
    %400 = vmatpush1.msra.mxu0 0.0
    %401 = vmatprep.subr.mxu0 0.0
    %402 = vmatpush1.msra.mxu0 0.0
    %403 = vmatprep.subr.mxu0 0.0
    %404 = vmatpush1.msra.mxu0 0.0
    %405 = vmatprep.subr.mxu0 0.0
    %406 = vmatpush1.msra.mxu0 0.0
    %407 = vmatprep.subr.mxu0 0.0
    %408 = vmatpush1.msra.mxu0 0.0
    %409 = vmatprep.subr.mxu0 0.0
    %410 = vmatpush1.msra.mxu0 0.0
    %411 = vmatprep.subr.mxu0 0.0
    %412 = vmatpush1.msra.mxu0 0.0
    %413 = vmatprep.subr.mxu0 0.0
    %414 = vmatpush1.msra.mxu0 0.0
    %415 = vmatprep.subr.mxu0 0.0
    %416 = vmatpush1.msra.mxu0 0.0
    %417 = vmatprep.subr.mxu0 0.0
    %418 = vmatpush1.msra.mxu0 0.0
    %419 = vmatprep.subr.mxu0 0.0
    %420 = vmatpush1.msra.mxu0 0.0
    %421 = vmatprep.subr.mxu0 0.0
    %422 = vmatpush1.msra.mxu0 0.0
    %423 = vmatprep.subr.mxu0 0.0
    %424 = vmatpush1.msra.mxu0 0.0
    %425 = vmatprep.subr.mxu0 0.0
    %426 = vmatpush1.msra.mxu0 0.0
    %427 = vmatprep.subr.mxu0 0.0
    %428 = vmatpush1.msra.mxu0 0.0
    %429 = vmatprep.subr.mxu0 0.0
    %430 = vmatpush1.msra.mxu0 0.0
    %431 = vmatprep.subr.mxu0 0.0
    %432 = vmatpush1.msra.mxu0 0.0
    %433 = vmatprep.subr.mxu0 0.0
    %434 = vmatpush1.msra.mxu0 0.0
    %435 = vmatprep.subr.mxu0 0.0
    %436 = vmatpush1.msra.mxu0 0.0
    %437 = vmatprep.subr.mxu0 0.0
    %438 = vmatpush1.msra.mxu0 0.0
    %439 = vmatprep.subr.mxu0 0.0
    %440 = vmatpush1.msra.mxu0 0.0
    %441 = vmatprep.subr.mxu0 0.0
    %442 = vmatpush1.msra.mxu0 0.0
    %443 = vmatprep.subr.mxu0 0.0
    %444 = vmatpush1.msra.mxu0 0.0
    %445 = vmatprep.mubr.f32.mxu0 0.0
    %446 = vmatmul.mubr.f32.gmra.mrb[0].mxu0 %v379
    %v447 = vpop.f32.mrb[0].mxu0
    %v448 = vadd.f32 0.0, %v447
    %v449 = vpop.f32.mrb[0].mxu0
    %450 = vdwg.mxu0
    %v451 = vadd.f32 %v348, %v448
    %v452 = vmul.f32 %v451, 0.25
    %v453 = vld [vmem:[%s1] sm:$0xff]
    %v454 = vld [vmem:[%s5] sm:$0x1]
    %v456 = vlaneseq
    %v457 = vshrl.u32 %v456, 7
    %v458 = vsub.s32 0, %v457
    %v459 = vrot.slane %v454, %v458
    %v461 = vadd.f32 %v453, %v459
    %v462 = vld [vmem:[%s6] sm:$0xff]
    %v463 = vld [vmem:[%s6 + $0x8] sm:$0xff]
    %v464 = vld [vmem:[%s6 + $0x10] sm:$0xff]
    %v465 = vld [vmem:[%s6 + $0x18] sm:$0xff]
    %v466 = vld [vmem:[%s6 + $0x20] sm:$0xff]
    %v467 = vld [vmem:[%s6 + $0x28] sm:$0xff]
    %v468 = vld [vmem:[%s6 + $0x30] sm:$0xff]
    %v469 = vld [vmem:[%s6 + $0x38] sm:$0xff]
    %v470 = vld [vmem:[%s6 + $0x40] sm:$0xff]
    %v471 = vld [vmem:[%s6 + $0x48] sm:$0xff]
    %v472 = vld [vmem:[%s6 + $0x50] sm:$0xff]
    %v473 = vld [vmem:[%s6 + $0x58] sm:$0xff]
    %v474 = vld [vmem:[%s6 + $0x60] sm:$0xff]
    %v475 = vld [vmem:[%s6 + $0x68] sm:$0xff]
    %v476 = vld [vmem:[%s6 + $0x70] sm:$0xff]
    %v477 = vld [vmem:[%s6 + $0x78] sm:$0xff]
    %478 = vmatprep.subr.mxu0 0.0
    %479 = vmatpush1.msra.mxu0 %v462
    %480 = vmatprep.subr.mxu0 0.0
    %481 = vmatpush1.msra.mxu0 %v463
    %482 = vmatprep.subr.mxu0 0.0
    %483 = vmatpush1.msra.mxu0 %v464
    %484 = vmatprep.subr.mxu0 0.0
    %485 = vmatpush1.msra.mxu0 %v465
    %486 = vmatprep.subr.mxu0 0.0
    %487 = vmatpush1.msra.mxu0 %v466
    %488 = vmatprep.subr.mxu0 0.0
    %489 = vmatpush1.msra.mxu0 %v467
    %490 = vmatprep.subr.mxu0 0.0
    %491 = vmatpush1.msra.mxu0 %v468
    %492 = vmatprep.subr.mxu0 0.0
    %493 = vmatpush1.msra.mxu0 %v469
    %494 = vmatprep.subr.mxu0 0.0
    %495 = vmatpush1.msra.mxu0 %v470
    %496 = vmatprep.subr.mxu0 0.0
    %497 = vmatpush1.msra.mxu0 %v471
    %498 = vmatprep.subr.mxu0 0.0
    %499 = vmatpush1.msra.mxu0 %v472
    %500 = vmatprep.subr.mxu0 0.0
    %501 = vmatpush1.msra.mxu0 %v473
    %502 = vmatprep.subr.mxu0 0.0
    %503 = vmatpush1.msra.mxu0 %v474
    %504 = vmatprep.subr.mxu0 0.0
    %505 = vmatpush1.msra.mxu0 %v475
    %506 = vmatprep.subr.mxu0 0.0
    %507 = vmatpush1.msra.mxu0 %v476
    %508 = vmatprep.subr.mxu0 0.0
    %509 = vmatpush1.msra.mxu0 %v477
    %510 = vmatprep.subr.mxu0 0.0
    %511 = vmatpush1.msra.mxu0 0.0
    %512 = vmatprep.subr.mxu0 0.0
    %513 = vmatpush1.msra.mxu0 0.0
    %514 = vmatprep.subr.mxu0 0.0
    %515 = vmatpush1.msra.mxu0 0.0
    %516 = vmatprep.subr.mxu0 0.0
    %517 = vmatpush1.msra.mxu0 0.0
    %518 = vmatprep.subr.mxu0 0.0
    %519 = vmatpush1.msra.mxu0 0.0
    %520 = vmatprep.subr.mxu0 0.0
    %521 = vmatpush1.msra.mxu0 0.0
    %522 = vmatprep.subr.mxu0 0.0
    %523 = vmatpush1.msra.mxu0 0.0
    %524 = vmatprep.subr.mxu0 0.0
    %525 = vmatpush1.msra.mxu0 0.0
    %526 = vmatprep.subr.mxu0 0.0
    %527 = vmatpush1.msra.mxu0 0.0
    %528 = vmatprep.subr.mxu0 0.0
    %529 = vmatpush1.msra.mxu0 0.0
    %530 = vmatprep.subr.mxu0 0.0
    %531 = vmatpush1.msra.mxu0 0.0
    %532 = vmatprep.subr.mxu0 0.0
    %533 = vmatpush1.msra.mxu0 0.0
    %534 = vmatprep.subr.mxu0 0.0
    %535 = vmatpush1.msra.mxu0 0.0
    %536 = vmatprep.subr.mxu0 0.0
    %537 = vmatpush1.msra.mxu0 0.0
    %538 = vmatprep.subr.mxu0 0.0
    %539 = vmatpush1.msra.mxu0 0.0
    %540 = vmatprep.subr.mxu0 0.0
    %541 = vmatpush1.msra.mxu0 0.0
    %542 = vmatprep.mubr.f32.mxu0 0.0
    %543 = vmatmul.mubr.f32.gmra.mrb[0].mxu0 %v461
    %v544 = vpop.f32.mrb[0].mxu0
    %v545 = vadd.f32 0.0, %v544
    %v546 = vpop.f32.mrb[0].mxu0
    %547 = vdwg.mxu0
    %v548 = vadd.f32 %v452, %v545
    %v549 = vmax.f32 %v548, 0.0
    %v550 = vld [vmem:[%s7] sm:$0xff]
    %v551 = vld [vmem:[%s7 + $0x8] sm:$0xff]
    %v552 = vld [vmem:[%s7 + $0x10] sm:$0xff]
    %v553 = vld [vmem:[%s7 + $0x18] sm:$0xff]
    %v554 = vld [vmem:[%s8] sm:$0x1]
    %v556 = vlaneseq
    %v557 = vshrl.u32 %v556, 7
    %v558 = vsub.s32 0, %v557
    %v559 = vrot.slane %v554, %v558
    %vm561 = vcmask 261120
    %v563 = vsel %vm561, %v549, 0
    %565 = vmatprep.subr.mxu0 0.0
    %566 = vmatpush1.msra.mxu0 %v550
    %567 = vmatprep.subr.mxu0 0.0
    %568 = vmatpush1.msra.mxu0 %v551
    %569 = vmatprep.subr.mxu0 0.0
    %570 = vmatpush1.msra.mxu0 %v552
    %571 = vmatprep.subr.mxu0 0.0
    %572 = vmatpush1.msra.mxu0 %v553
    %573 = vmatprep.subr.mxu0 0.0
    %574 = vmatpush1.msra.mxu0 0.0
    %575 = vmatprep.subr.mxu0 0.0
    %576 = vmatpush1.msra.mxu0 0.0
    %577 = vmatprep.subr.mxu0 0.0
    %578 = vmatpush1.msra.mxu0 0.0
    %579 = vmatprep.subr.mxu0 0.0
    %580 = vmatpush1.msra.mxu0 0.0
    %581 = vmatprep.subr.mxu0 0.0
    %582 = vmatpush1.msra.mxu0 0.0
    %583 = vmatprep.subr.mxu0 0.0
    %584 = vmatpush1.msra.mxu0 0.0
    %585 = vmatprep.subr.mxu0 0.0
    %586 = vmatpush1.msra.mxu0 0.0
    %587 = vmatprep.subr.mxu0 0.0
    %588 = vmatpush1.msra.mxu0 0.0
    %589 = vmatprep.subr.mxu0 0.0
    %590 = vmatpush1.msra.mxu0 0.0
    %591 = vmatprep.subr.mxu0 0.0
    %592 = vmatpush1.msra.mxu0 0.0
    %593 = vmatprep.subr.mxu0 0.0
    %594 = vmatpush1.msra.mxu0 0.0
    %595 = vmatprep.subr.mxu0 0.0
    %596 = vmatpush1.msra.mxu0 0.0
    %597 = vmatprep.subr.mxu0 0.0
    %598 = vmatpush1.msra.mxu0 0.0
    %599 = vmatprep.subr.mxu0 0.0
    %600 = vmatpush1.msra.mxu0 0.0
    %601 = vmatprep.subr.mxu0 0.0
    %602 = vmatpush1.msra.mxu0 0.0
    %603 = vmatprep.subr.mxu0 0.0
    %604 = vmatpush1.msra.mxu0 0.0
    %605 = vmatprep.subr.mxu0 0.0
    %606 = vmatpush1.msra.mxu0 0.0
    %607 = vmatprep.subr.mxu0 0.0
    %608 = vmatpush1.msra.mxu0 0.0
    %609 = vmatprep.subr.mxu0 0.0
    %610 = vmatpush1.msra.mxu0 0.0
    %611 = vmatprep.subr.mxu0 0.0
    %612 = vmatpush1.msra.mxu0 0.0
    %613 = vmatprep.subr.mxu0 0.0
    %614 = vmatpush1.msra.mxu0 0.0
    %615 = vmatprep.subr.mxu0 0.0
    %616 = vmatpush1.msra.mxu0 0.0
    %617 = vmatprep.subr.mxu0 0.0
    %618 = vmatpush1.msra.mxu0 0.0
    %619 = vmatprep.subr.mxu0 0.0
    %620 = vmatpush1.msra.mxu0 0.0
    %621 = vmatprep.subr.mxu0 0.0
    %622 = vmatpush1.msra.mxu0 0.0
    %623 = vmatprep.subr.mxu0 0.0
    %624 = vmatpush1.msra.mxu0 0.0
    %625 = vmatprep.subr.mxu0 0.0
    %626 = vmatpush1.msra.mxu0 0.0
    %627 = vmatprep.subr.mxu0 0.0
    %628 = vmatpush1.msra.mxu0 0.0
    %629 = vmatprep.mubr.f32.mxu0 0.0
    %630 = vmatmul.mubr.f32.gmra.mrb[0].mxu0 %v563
    %v631 = vpop.f32.mrb[0].mxu0
    %v632 = vadd.f32 %v559, %v631
    %v633 = vpop.f32.mrb[0].mxu0
    %634 = vdwg.mxu0
    %vm635 = vcmask 15360
    %v636 = vsel %vm635, %v632, -inf
    %637 = vmax.xlane.f32.xlu0 %v636
    %v638 = vpop.xlane.xlu0 %637
    %v639 = vsub.f32 %v632, %v638
    %v640 = vmul.f32 %v639, 1.442695
    %v641 = vpow.pop %v640
    %v642 = vsel %vm635, %v641, 0.0
    %643 = vadd.xlane.f32.xlu0 %v642
    %v644 = vpop.xlane.xlu0 %643
    %v645 = vrcp.pop %v644
    %v646 = vmul.f32 %v641, %v645
    %647 = vst.msk [vmem:[%s10] sm:$0xff] %vm635, %v646
    // Predicated region
    $region38: #{gnn_forward.3} parent=1 // pred_check
      _
    $region39: #{gnn_forward.3} parent=1 // pred_check_branch
      %649 = sbr.rel (0) target = $region41
    $region40: #{gnn_forward.3} parent=1 // pred_region
      %s651 = ssub.s32 512, 512
      %652 = vsyncadd [#allocation3], %s651
      %s653 = sshll.u32 [#allocation2], 4
      %s654 = int_to_ptr.vmem [resolvable:$true] %s653
      %659 = dma.vmem_to_hbm [thread:$0]  %s654, 512, %s9, [#allocation3], 128, 128, 8
    $region41: #{gnn_forward.3} parent=1 // pred_fallthru
      _
    // Predicated region
    $region42: #{gnn_forward.3} parent=1 // pred_check
      _
    $region43: #{gnn_forward.3} parent=1 // pred_check_branch
      %661 = sbr.rel (0) target = $region45
    $region44: #{gnn_forward.3} parent=1 // pred_region
      _
    $region45: #{gnn_forward.3} parent=1 // pred_fallthru
      _
    // Predicated region
    $region46: #{gnn_forward.3} parent=1 // pred_check
      _
    $region47: #{gnn_forward.3} parent=1 // pred_check_branch
      %663 = sbr.rel (0) target = $region49
    $region48: #{gnn_forward.3} parent=1 // pred_region
      %664 = dma.done [#allocation3], 512
    $region49: #{gnn_forward.3} parent=1 // pred_fallthru
      _
    // Predicated region
    $region50: #{gnn_forward.3} parent=1 // pred_check
      _
    $region51: #{gnn_forward.3} parent=1 // pred_check_branch
      %666 = sbr.rel (0) target = $region53
    $region52: #{gnn_forward.3} parent=1 // pred_region
      _
    $region53: #{gnn_forward.3} parent=1 // pred_fallthru
      _
    %667 = vsyncpa [#allocation3], 1

// kernel: gnn_forward.2
$region0: #{gnn_forward.2}
  #allocation0 [shape = 'u32[]', space=smem, size = 0x4, offset = 0x4, fixed_abs, tag = 'smem constant byte address 0x4 - core index']
  #allocation1 [shape = 'u32[144,128]{1,0:T(1,128)}', space=vmem, size = 0x12000, scoped, tag = 'internal scratch']
  %s0 = inlined_call_operand.vmem [shape: s8[8,8], index: 0, kind: input, shape index: {}]
  %s1 = inlined_call_operand.vmem [shape: f32[8,21], index: 1, kind: input, shape index: {}]
  %s2 = inlined_call_operand.vmem [shape: f32[21,128], index: 2, kind: input, shape index: {}]
  %s3 = inlined_call_operand.vmem [shape: f32[128,4], index: 3, kind: input, shape index: {}]
  %s4 = inlined_call_operand.vmem [shape: f32[21,4], index: 4, kind: input, shape index: {}]
  %s5 = inlined_call_operand.vmem [shape: f32[21,128], index: 5, kind: input, shape index: {}]
  %s6 = inlined_call_operand.vmem [shape: f32[1,128], index: 6, kind: input, shape index: {}]
  %s7 = inlined_call_operand.vmem [shape: f32[128,128], index: 7, kind: input, shape index: {}]
  %s8 = inlined_call_operand.vmem [shape: f32[128,8], index: 8, kind: input, shape index: {}]
  %s9 = inlined_call_operand.vmem [shape: f32[8,128], index: 9, kind: output, shape index: {0}]
  %s10 = inlined_call_operand.vmem [shape: f32[8,128], index: 10, kind: output, shape index: {1}]
  %s11 = inlined_call_operand.vmem [shape: f32[4,8], index: 11, kind: output, shape index: {2}]
  %s12 = inlined_call_operand.vmem [shape: f32[8,4], index: 12, kind: output, shape index: {3}]
  %13 = xla_tuple %s9, %s10, %s11, %s12
  %s14 = sld [smem:[#allocation0]]
  $region70: #{gnn_forward.2} parent=0
    _
  %s16 = ssub.s32 1, %s14
  %s17 = scalar_select 0, %s16, %s14
  // Predicated region
  $region2: #{gnn_forward.2} parent=0 // pred_check
    _
  $region3: #{gnn_forward.2} parent=0 // pred_check_branch
    %19 = sbr.rel (0) target = $region5
  $region4: #{gnn_forward.2} parent=0 // pred_region
    _
  $region5: #{gnn_forward.2} parent=0 // pred_fallthru
    _
  // Predicated region
  $region6: #{gnn_forward.2} parent=0 // pred_check
    _
  $region7: #{gnn_forward.2} parent=0 // pred_check_branch
    %21 = sbr.rel (0) target = $region9
  $region8: #{gnn_forward.2} parent=0 // pred_region
    _
  $region9: #{gnn_forward.2} parent=0 // pred_fallthru
    _
  // Predicated region
  $region10: #{gnn_forward.2} parent=0 // pred_check
    _
  $region11: #{gnn_forward.2} parent=0 // pred_check_branch
    %23 = sbr.rel (0) target = $region13
  $region12: #{gnn_forward.2} parent=0 // pred_region
    _
  $region13: #{gnn_forward.2} parent=0 // pred_fallthru
    _
  // Predicated region
  $region14: #{gnn_forward.2} parent=0 // pred_check
    _
  $region15: #{gnn_forward.2} parent=0 // pred_check_branch
    %25 = sbr.rel (0) target = $region17
  $region16: #{gnn_forward.2} parent=0 // pred_region
    _
  $region17: #{gnn_forward.2} parent=0 // pred_fallthru
    _
  // Predicated region
  $region18: #{gnn_forward.2} parent=0 // pred_check
    _
  $region19: #{gnn_forward.2} parent=0 // pred_check_branch
    %27 = sbr.rel (0) target = $region21
  $region20: #{gnn_forward.2} parent=0 // pred_region
    _
  $region21: #{gnn_forward.2} parent=0 // pred_fallthru
    _
  // Predicated region
  $region22: #{gnn_forward.2} parent=0 // pred_check
    _
  $region23: #{gnn_forward.2} parent=0 // pred_check_branch
    %29 = sbr.rel (0) target = $region25
  $region24: #{gnn_forward.2} parent=0 // pred_region
    _
  $region25: #{gnn_forward.2} parent=0 // pred_fallthru
    _
  // Predicated region
  $region26: #{gnn_forward.2} parent=0 // pred_check
    _
  $region27: #{gnn_forward.2} parent=0 // pred_check_branch
    %31 = sbr.rel (0) target = $region29
  $region28: #{gnn_forward.2} parent=0 // pred_region
    _
  $region29: #{gnn_forward.2} parent=0 // pred_fallthru
    _
  // Predicated region
  $region30: #{gnn_forward.2} parent=0 // pred_check
    _
  $region31: #{gnn_forward.2} parent=0 // pred_check_branch
    %33 = sbr.rel (0) target = $region33
  $region32: #{gnn_forward.2} parent=0 // pred_region
    _
  $region33: #{gnn_forward.2} parent=0 // pred_fallthru
    _
  // Predicated region
  $region34: #{gnn_forward.2} parent=0 // pred_check
    _
  $region35: #{gnn_forward.2} parent=0 // pred_check_branch
    %35 = sbr.rel (0) target = $region37
  $region36: #{gnn_forward.2} parent=0 // pred_region
    _
  $region37: #{gnn_forward.2} parent=0 // pred_fallthru
    _
  %s36 = smul.u32 0, 8
  %v37 = vld [vmem:[%s1] sm:$0xff]
  %s38 = scalar_lea.vmem %s1, %s36
  %v39 = vld [vmem:[%s38] sm:$0xff]
  %v40 = vld [vmem:[%s2] sm:$0xff]
  %v41 = vld [vmem:[%s2 + $0x8] sm:$0xff]
  %v42 = vld [vmem:[%s2 + $0x10] sm:$0x1f]
  %vm43 = vcmask 171008
  %v45 = vsel %vm43, %v37, 0
  %vm47 = vcmask 1044480
  %v49 = vsel %vm47, %v42, 0
  %51 = vmatprep.subr.mxu0 0.0
  %52 = vmatpush1.msra.mxu0 %v40
  %53 = vmatprep.subr.mxu0 0.0
  %54 = vmatpush1.msra.mxu0 %v41
  %55 = vmatprep.subr.mxu0 0.0
  %56 = vmatpush1.msra.mxu0 %v49
  %57 = vmatprep.subr.mxu0 0.0
  %58 = vmatpush1.msra.mxu0 0.0
  %59 = vmatprep.subr.mxu0 0.0
  %60 = vmatpush1.msra.mxu0 0.0
  %61 = vmatprep.subr.mxu0 0.0
  %62 = vmatpush1.msra.mxu0 0.0
  %63 = vmatprep.subr.mxu0 0.0
  %64 = vmatpush1.msra.mxu0 0.0
  %65 = vmatprep.subr.mxu0 0.0
  %66 = vmatpush1.msra.mxu0 0.0
  %67 = vmatprep.subr.mxu0 0.0
  %68 = vmatpush1.msra.mxu0 0.0
  %69 = vmatprep.subr.mxu0 0.0
  %70 = vmatpush1.msra.mxu0 0.0
  %71 = vmatprep.subr.mxu0 0.0
  %72 = vmatpush1.msra.mxu0 0.0
  %73 = vmatprep.subr.mxu0 0.0
  %74 = vmatpush1.msra.mxu0 0.0
  %75 = vmatprep.subr.mxu0 0.0
  %76 = vmatpush1.msra.mxu0 0.0
  %77 = vmatprep.subr.mxu0 0.0
  %78 = vmatpush1.msra.mxu0 0.0
  %79 = vmatprep.subr.mxu0 0.0
  %80 = vmatpush1.msra.mxu0 0.0
  %81 = vmatprep.subr.mxu0 0.0
  %82 = vmatpush1.msra.mxu0 0.0
  %83 = vmatprep.subr.mxu0 0.0
  %84 = vmatpush1.msra.mxu0 0.0
  %85 = vmatprep.subr.mxu0 0.0
  %86 = vmatpush1.msra.mxu0 0.0
  %87 = vmatprep.subr.mxu0 0.0
  %88 = vmatpush1.msra.mxu0 0.0
  %89 = vmatprep.subr.mxu0 0.0
  %90 = vmatpush1.msra.mxu0 0.0
  %91 = vmatprep.subr.mxu0 0.0
  %92 = vmatpush1.msra.mxu0 0.0
  %93 = vmatprep.subr.mxu0 0.0
  %94 = vmatpush1.msra.mxu0 0.0
  %95 = vmatprep.subr.mxu0 0.0
  %96 = vmatpush1.msra.mxu0 0.0
  %97 = vmatprep.subr.mxu0 0.0
  %98 = vmatpush1.msra.mxu0 0.0
  %99 = vmatprep.subr.mxu0 0.0
  %100 = vmatpush1.msra.mxu0 0.0
  %101 = vmatprep.subr.mxu0 0.0
  %102 = vmatpush1.msra.mxu0 0.0
  %103 = vmatprep.subr.mxu0 0.0
  %104 = vmatpush1.msra.mxu0 0.0
  %105 = vmatprep.subr.mxu0 0.0
  %106 = vmatpush1.msra.mxu0 0.0
  %107 = vmatprep.subr.mxu0 0.0
  %108 = vmatpush1.msra.mxu0 0.0
  %109 = vmatprep.subr.mxu0 0.0
  %110 = vmatpush1.msra.mxu0 0.0
  %111 = vmatprep.subr.mxu0 0.0
  %112 = vmatpush1.msra.mxu0 0.0
  %113 = vmatprep.subr.mxu0 0.0
  %114 = vmatpush1.msra.mxu0 0.0
  %115 = vmatprep.mubr.f32.mxu0 0.0
  %116 = vmatmul.mubr.f32.gmra.mrb[0].mxu0 %v45
  %v117 = vpop.f32.mrb[0].mxu0
  %v118 = vadd.f32 0.0, %v117
  %v119 = vpop.f32.mrb[0].mxu0
  %120 = vdwg.mxu0
  %v121 = vld [vmem:[%s3] sm:$0xff]
  %v122 = vld [vmem:[%s3 + $0x8] sm:$0xff]
  %v123 = vld [vmem:[%s3 + $0x10] sm:$0xff]
  %v124 = vld [vmem:[%s3 + $0x18] sm:$0xff]
  %v125 = vld [vmem:[%s3 + $0x20] sm:$0xff]
  %v126 = vld [vmem:[%s3 + $0x28] sm:$0xff]
  %v127 = vld [vmem:[%s3 + $0x30] sm:$0xff]
  %v128 = vld [vmem:[%s3 + $0x38] sm:$0xff]
  %v129 = vld [vmem:[%s3 + $0x40] sm:$0xff]
  %v130 = vld [vmem:[%s3 + $0x48] sm:$0xff]
  %v131 = vld [vmem:[%s3 + $0x50] sm:$0xff]
  %v132 = vld [vmem:[%s3 + $0x58] sm:$0xff]
  %v133 = vld [vmem:[%s3 + $0x60] sm:$0xff]
  %v134 = vld [vmem:[%s3 + $0x68] sm:$0xff]
  %v135 = vld [vmem:[%s3 + $0x70] sm:$0xff]
  %v136 = vld [vmem:[%s3 + $0x78] sm:$0xff]
  %137 = vmatprep.subr.mxu0 0.0
  %138 = vmatpush1.msra.mxu0 %v121
  %139 = vmatprep.subr.mxu0 0.0
  %140 = vmatpush1.msra.mxu0 %v122
  %141 = vmatprep.subr.mxu0 0.0
  %142 = vmatpush1.msra.mxu0 %v123
  %143 = vmatprep.subr.mxu0 0.0
  %144 = vmatpush1.msra.mxu0 %v124
  %145 = vmatprep.subr.mxu0 0.0
  %146 = vmatpush1.msra.mxu0 %v125
  %147 = vmatprep.subr.mxu0 0.0
  %148 = vmatpush1.msra.mxu0 %v126
  %149 = vmatprep.subr.mxu0 0.0
  %150 = vmatpush1.msra.mxu0 %v127
  %151 = vmatprep.subr.mxu0 0.0
  %152 = vmatpush1.msra.mxu0 %v128
  %153 = vmatprep.subr.mxu0 0.0
  %154 = vmatpush1.msra.mxu0 %v129
  %155 = vmatprep.subr.mxu0 0.0
  %156 = vmatpush1.msra.mxu0 %v130
  %157 = vmatprep.subr.mxu0 0.0
  %158 = vmatpush1.msra.mxu0 %v131
  %159 = vmatprep.subr.mxu0 0.0
  %160 = vmatpush1.msra.mxu0 %v132
  %161 = vmatprep.subr.mxu0 0.0
  %162 = vmatpush1.msra.mxu0 %v133
  %163 = vmatprep.subr.mxu0 0.0
  %164 = vmatpush1.msra.mxu0 %v134
  %165 = vmatprep.subr.mxu0 0.0
  %166 = vmatpush1.msra.mxu0 %v135
  %167 = vmatprep.subr.mxu0 0.0
  %168 = vmatpush1.msra.mxu0 %v136
  %169 = vmatprep.subr.mxu0 0.0
  %170 = vmatpush1.msra.mxu0 0.0
  %171 = vmatprep.subr.mxu0 0.0
  %172 = vmatpush1.msra.mxu0 0.0
  %173 = vmatprep.subr.mxu0 0.0
  %174 = vmatpush1.msra.mxu0 0.0
  %175 = vmatprep.subr.mxu0 0.0
  %176 = vmatpush1.msra.mxu0 0.0
  %177 = vmatprep.subr.mxu0 0.0
  %178 = vmatpush1.msra.mxu0 0.0
  %179 = vmatprep.subr.mxu0 0.0
  %180 = vmatpush1.msra.mxu0 0.0
  %181 = vmatprep.subr.mxu0 0.0
  %182 = vmatpush1.msra.mxu0 0.0
  %183 = vmatprep.subr.mxu0 0.0
  %184 = vmatpush1.msra.mxu0 0.0
  %185 = vmatprep.subr.mxu0 0.0
  %186 = vmatpush1.msra.mxu0 0.0
  %187 = vmatprep.subr.mxu0 0.0
  %188 = vmatpush1.msra.mxu0 0.0
  %189 = vmatprep.subr.mxu0 0.0
  %190 = vmatpush1.msra.mxu0 0.0
  %191 = vmatprep.subr.mxu0 0.0
  %192 = vmatpush1.msra.mxu0 0.0
  %193 = vmatprep.subr.mxu0 0.0
  %194 = vmatpush1.msra.mxu0 0.0
  %195 = vmatprep.subr.mxu0 0.0
  %196 = vmatpush1.msra.mxu0 0.0
  %197 = vmatprep.subr.mxu0 0.0
  %198 = vmatpush1.msra.mxu0 0.0
  %199 = vmatprep.subr.mxu0 0.0
  %200 = vmatpush1.msra.mxu0 0.0
  %201 = vmatprep.mubr.f32.mxu0 0.0
  %202 = vmatmul.mubr.f32.gmra.mrb[0].mxu0 %v118
  %v203 = vpop.f32.mrb[0].mxu0
  %v204 = vadd.f32 0.0, %v203
  %v205 = vpop.f32.mrb[0].mxu0
  %206 = vdwg.mxu0
  %207 = vxpose.xlu0.b32.start [1/16] %v204, 128
  %208 = vxpose.xlu0.b32.cont [2/16] 0.0, 128
  %209 = vxpose.xlu0.b32.cont [3/16] 0.0, 128
  %210 = vxpose.xlu0.b32.cont [4/16] 0.0, 128
  %211 = vxpose.xlu0.b32.cont [5/16] 0.0, 128
  %212 = vxpose.xlu0.b32.cont [6/16] 0.0, 128
  %213 = vxpose.xlu0.b32.cont [7/16] 0.0, 128
  %214 = vxpose.xlu0.b32.cont [8/16] 0.0, 128
  %215 = vxpose.xlu0.b32.cont [9/16] 0.0, 128
  %216 = vxpose.xlu0.b32.cont [10/16] 0.0, 128
  %217 = vxpose.xlu0.b32.cont [11/16] 0.0, 128
  %218 = vxpose.xlu0.b32.cont [12/16] 0.0, 128
  %219 = vxpose.xlu0.b32.cont [13/16] 0.0, 128
  %220 = vxpose.xlu0.b32.cont [14/16] 0.0, 128
  %221 = vxpose.xlu0.b32.cont [15/16] 0.0, 128
  %222 = vxpose.xlu0.b32.end [16/16] 0.0, 128
  %v223 = vpop.trf.xlu0
  %v224 = vpop.trf.xlu0
  %v225 = vpop.trf.xlu0
  %v226 = vpop.trf.xlu0
  %v227 = vpop.trf.xlu0
  %v228 = vpop.trf.xlu0
  %v229 = vpop.trf.xlu0
  %v230 = vpop.trf.xlu0
  %v231 = vpop.trf.xlu0
  %v232 = vpop.trf.xlu0
  %v233 = vpop.trf.xlu0
  %v234 = vpop.trf.xlu0
  %v235 = vpop.trf.xlu0
  %v236 = vpop.trf.xlu0
  %v237 = vpop.trf.xlu0
  %v238 = vpop.trf.xlu0
  %v239 = vld [vmem:[%s4] sm:$0xff]
  %v240 = vld [vmem:[%s4 + $0x8] sm:$0xff]
  %v241 = vld [vmem:[%s4 + $0x10] sm:$0x1f]
  %v243 = vsel %vm43, %v39, 0
  %v246 = vsel %vm47, %v241, 0
  %248 = vmatprep.subr.mxu0 0.0
  %249 = vmatpush1.msra.mxu0 %v239
  %250 = vmatprep.subr.mxu0 0.0
  %251 = vmatpush1.msra.mxu0 %v240
  %252 = vmatprep.subr.mxu0 0.0
  %253 = vmatpush1.msra.mxu0 %v246
  %254 = vmatprep.subr.mxu0 0.0
  %255 = vmatpush1.msra.mxu0 0.0
  %256 = vmatprep.subr.mxu0 0.0
  %257 = vmatpush1.msra.mxu0 0.0
  %258 = vmatprep.subr.mxu0 0.0
  %259 = vmatpush1.msra.mxu0 0.0
  %260 = vmatprep.subr.mxu0 0.0
  %261 = vmatpush1.msra.mxu0 0.0
  %262 = vmatprep.subr.mxu0 0.0
  %263 = vmatpush1.msra.mxu0 0.0
  %264 = vmatprep.subr.mxu0 0.0
  %265 = vmatpush1.msra.mxu0 0.0
  %266 = vmatprep.subr.mxu0 0.0
  %267 = vmatpush1.msra.mxu0 0.0
  %268 = vmatprep.subr.mxu0 0.0
  %269 = vmatpush1.msra.mxu0 0.0
  %270 = vmatprep.subr.mxu0 0.0
  %271 = vmatpush1.msra.mxu0 0.0
  %272 = vmatprep.subr.mxu0 0.0
  %273 = vmatpush1.msra.mxu0 0.0
  %274 = vmatprep.subr.mxu0 0.0
  %275 = vmatpush1.msra.mxu0 0.0
  %276 = vmatprep.subr.mxu0 0.0
  %277 = vmatpush1.msra.mxu0 0.0
  %278 = vmatprep.subr.mxu0 0.0
  %279 = vmatpush1.msra.mxu0 0.0
  %280 = vmatprep.subr.mxu0 0.0
  %281 = vmatpush1.msra.mxu0 0.0
  %282 = vmatprep.subr.mxu0 0.0
  %283 = vmatpush1.msra.mxu0 0.0
  %284 = vmatprep.subr.mxu0 0.0
  %285 = vmatpush1.msra.mxu0 0.0
  %286 = vmatprep.subr.mxu0 0.0
  %287 = vmatpush1.msra.mxu0 0.0
  %288 = vmatprep.subr.mxu0 0.0
  %289 = vmatpush1.msra.mxu0 0.0
  %290 = vmatprep.subr.mxu0 0.0
  %291 = vmatpush1.msra.mxu0 0.0
  %292 = vmatprep.subr.mxu0 0.0
  %293 = vmatpush1.msra.mxu0 0.0
  %294 = vmatprep.subr.mxu0 0.0
  %295 = vmatpush1.msra.mxu0 0.0
  %296 = vmatprep.subr.mxu0 0.0
  %297 = vmatpush1.msra.mxu0 0.0
  %298 = vmatprep.subr.mxu0 0.0
  %299 = vmatpush1.msra.mxu0 0.0
  %300 = vmatprep.subr.mxu0 0.0
  %301 = vmatpush1.msra.mxu0 0.0
  %302 = vmatprep.subr.mxu0 0.0
  %303 = vmatpush1.msra.mxu0 0.0
  %304 = vmatprep.subr.mxu0 0.0
  %305 = vmatpush1.msra.mxu0 0.0
  %306 = vmatprep.subr.mxu0 0.0
  %307 = vmatpush1.msra.mxu0 0.0
  %308 = vmatprep.subr.mxu0 0.0
  %309 = vmatpush1.msra.mxu0 0.0
  %310 = vmatprep.subr.mxu0 0.0
  %311 = vmatpush1.msra.mxu0 0.0
  %312 = vmatprep.mubr.f32.mxu0 0.0
  %313 = vmatmul.mubr.f32.gmra.mrb[0].mxu0 %v243
  %v314 = vpop.f32.mrb[0].mxu0
  %v315 = vadd.f32 0.0, %v314
  %v316 = vpop.f32.mrb[0].mxu0
  %317 = vdwg.mxu0
  %v318 = vld [vmem:[%s0] sm:$0x3]
  %v319 = vunpack.c.0.s8 %v318
  %v320 = vcvt.s32.f32 %v319
  %vm321 = vcmp.ne.f32.partialorder %v320, 0.0
  %v322 = vsel %vm321, 0.0, -1e+30
  %324 = vset.pattern.permute.xlu0 0
  %325 = vperm.xlu0 %324, %v315
  %v326 = vpop.permute.xlu0 %325
  %v328 = vlaneseq
  %v329 = vshrl.u32 %v328, 7
  %v330 = vsub.s32 0, %v329
  %v331 = vrot.slane %v223, %v330
  %v332 = vadd.f32 %v326, %v331
  %vm333 = vcmp.ge.f32.partialorder %v332, 0.0
  %v334 = vmul.f32 %v332, 0.2
  %v335 = vsel %vm333, %v332, %v334
  %v336 = vadd.f32 %v335, %v322
  %vm337 = vcmask 64512
  %v338 = vsel %vm337, %v336, -inf
  %339 = vmax.xlane.f32.xlu0 %v338
  %v340 = vpop.xlane.xlu0 %339
  %v341 = vsub.f32 %v336, %v340
  %v342 = vmul.f32 %v341, 1.442695
  %v343 = vpow.pop %v342
  %v344 = vsel %vm337, %v343, 0.0
  %345 = vadd.xlane.f32.xlu0 %v344
  %v346 = vpop.xlane.xlu0 %345
  %v347 = vrcp.pop %v346
  %v348 = vmul.f32 %v343, %v347
  %v350 = vsel %vm337, %v348, 0
  %352 = vmatprep.subr.mxu0 0.0
  %353 = vmatpush1.msra.mxu0 %v118
  %354 = vmatprep.subr.mxu0 0.0
  %355 = vmatpush1.msra.mxu0 0.0
  %356 = vmatprep.subr.mxu0 0.0
  %357 = vmatpush1.msra.mxu0 0.0
  %358 = vmatprep.subr.mxu0 0.0
  %359 = vmatpush1.msra.mxu0 0.0
  %360 = vmatprep.subr.mxu0 0.0
  %361 = vmatpush1.msra.mxu0 0.0
  %362 = vmatprep.subr.mxu0 0.0
  %363 = vmatpush1.msra.mxu0 0.0
  %364 = vmatprep.subr.mxu0 0.0
  %365 = vmatpush1.msra.mxu0 0.0
  %366 = vmatprep.subr.mxu0 0.0
  %367 = vmatpush1.msra.mxu0 0.0
  %368 = vmatprep.subr.mxu0 0.0
  %369 = vmatpush1.msra.mxu0 0.0
  %370 = vmatprep.subr.mxu0 0.0
  %371 = vmatpush1.msra.mxu0 0.0
  %372 = vmatprep.subr.mxu0 0.0
  %373 = vmatpush1.msra.mxu0 0.0
  %374 = vmatprep.subr.mxu0 0.0
  %375 = vmatpush1.msra.mxu0 0.0
  %376 = vmatprep.subr.mxu0 0.0
  %377 = vmatpush1.msra.mxu0 0.0
  %378 = vmatprep.subr.mxu0 0.0
  %379 = vmatpush1.msra.mxu0 0.0
  %380 = vmatprep.subr.mxu0 0.0
  %381 = vmatpush1.msra.mxu0 0.0
  %382 = vmatprep.subr.mxu0 0.0
  %383 = vmatpush1.msra.mxu0 0.0
  %384 = vmatprep.subr.mxu0 0.0
  %385 = vmatpush1.msra.mxu0 0.0
  %386 = vmatprep.subr.mxu0 0.0
  %387 = vmatpush1.msra.mxu0 0.0
  %388 = vmatprep.subr.mxu0 0.0
  %389 = vmatpush1.msra.mxu0 0.0
  %390 = vmatprep.subr.mxu0 0.0
  %391 = vmatpush1.msra.mxu0 0.0
  %392 = vmatprep.subr.mxu0 0.0
  %393 = vmatpush1.msra.mxu0 0.0
  %394 = vmatprep.subr.mxu0 0.0
  %395 = vmatpush1.msra.mxu0 0.0
  %396 = vmatprep.subr.mxu0 0.0
  %397 = vmatpush1.msra.mxu0 0.0
  %398 = vmatprep.subr.mxu0 0.0
  %399 = vmatpush1.msra.mxu0 0.0
  %400 = vmatprep.subr.mxu0 0.0
  %401 = vmatpush1.msra.mxu0 0.0
  %402 = vmatprep.subr.mxu0 0.0
  %403 = vmatpush1.msra.mxu0 0.0
  %404 = vmatprep.subr.mxu0 0.0
  %405 = vmatpush1.msra.mxu0 0.0
  %406 = vmatprep.subr.mxu0 0.0
  %407 = vmatpush1.msra.mxu0 0.0
  %408 = vmatprep.subr.mxu0 0.0
  %409 = vmatpush1.msra.mxu0 0.0
  %410 = vmatprep.subr.mxu0 0.0
  %411 = vmatpush1.msra.mxu0 0.0
  %412 = vmatprep.subr.mxu0 0.0
  %413 = vmatpush1.msra.mxu0 0.0
  %414 = vmatprep.subr.mxu0 0.0
  %415 = vmatpush1.msra.mxu0 0.0
  %416 = vmatprep.mubr.f32.mxu0 0.0
  %417 = vmatmul.mubr.f32.gmra.mrb[0].mxu0 %v350
  %v418 = vpop.f32.mrb[0].mxu0
  %v419 = vadd.f32 0.0, %v418
  %v420 = vpop.f32.mrb[0].mxu0
  %421 = vdwg.mxu0
  %vm422 = vcmask 261120
  %423 = vst.msk [vmem:[%s9] sm:$0xff] %vm422, %v419
  %424 = vset.pattern.permute.xlu0 1
  %425 = vperm.xlu0 %424, %v315
  %v426 = vpop.permute.xlu0 %425
  %v428 = vlaneseq
  %v429 = vshrl.u32 %v428, 7
  %v430 = vsub.s32 1, %v429
  %v431 = vrot.slane %v223, %v430
  %v432 = vadd.f32 %v426, %v431
  %vm433 = vcmp.ge.f32.partialorder %v432, 0.0
  %v434 = vmul.f32 %v432, 0.2
  %v435 = vsel %vm433, %v432, %v434
  %v436 = vadd.f32 %v435, %v322
  %v437 = vsel %vm337, %v436, -inf
  %438 = vmax.xlane.f32.xlu0 %v437
  %v439 = vpop.xlane.xlu0 %438
  %v440 = vsub.f32 %v436, %v439
  %v441 = vmul.f32 %v440, 1.442695
  %v442 = vpow.pop %v441
  %v443 = vsel %vm337, %v442, 0.0
  %444 = vadd.xlane.f32.xlu0 %v443
  %v445 = vpop.xlane.xlu0 %444
  %v446 = vrcp.pop %v445
  %v447 = vmul.f32 %v442, %v446
  %449 = vrot.lane.b32.xlu0 %v118, 96
  %v450 = vpop.permute.xlu0 %449
  %v453 = vsel %vm337, %v447, 0
  %455 = vmatprep.subr.mxu0 0.0
  %456 = vmatpush1.msra.mxu0 %v450
  %457 = vmatprep.subr.mxu0 0.0
  %458 = vmatpush1.msra.mxu0 0.0
  %459 = vmatprep.subr.mxu0 0.0
  %460 = vmatpush1.msra.mxu0 0.0
  %461 = vmatprep.subr.mxu0 0.0
  %462 = vmatpush1.msra.mxu0 0.0
  %463 = vmatprep.subr.mxu0 0.0
  %464 = vmatpush1.msra.mxu0 0.0
  %465 = vmatprep.subr.mxu0 0.0
  %466 = vmatpush1.msra.mxu0 0.0
  %467 = vmatprep.subr.mxu0 0.0
  %468 = vmatpush1.msra.mxu0 0.0
  %469 = vmatprep.subr.mxu0 0.0
  %470 = vmatpush1.msra.mxu0 0.0
  %471 = vmatprep.subr.mxu0 0.0
  %472 = vmatpush1.msra.mxu0 0.0
  %473 = vmatprep.subr.mxu0 0.0
  %474 = vmatpush1.msra.mxu0 0.0
  %475 = vmatprep.subr.mxu0 0.0
  %476 = vmatpush1.msra.mxu0 0.0
  %477 = vmatprep.subr.mxu0 0.0
  %478 = vmatpush1.msra.mxu0 0.0
  %479 = vmatprep.subr.mxu0 0.0
  %480 = vmatpush1.msra.mxu0 0.0
  %481 = vmatprep.subr.mxu0 0.0
  %482 = vmatpush1.msra.mxu0 0.0
  %483 = vmatprep.subr.mxu0 0.0
  %484 = vmatpush1.msra.mxu0 0.0
  %485 = vmatprep.subr.mxu0 0.0
  %486 = vmatpush1.msra.mxu0 0.0
  %487 = vmatprep.subr.mxu0 0.0
  %488 = vmatpush1.msra.mxu0 0.0
  %489 = vmatprep.subr.mxu0 0.0
  %490 = vmatpush1.msra.mxu0 0.0
  %491 = vmatprep.subr.mxu0 0.0
  %492 = vmatpush1.msra.mxu0 0.0
  %493 = vmatprep.subr.mxu0 0.0
  %494 = vmatpush1.msra.mxu0 0.0
  %495 = vmatprep.subr.mxu0 0.0
  %496 = vmatpush1.msra.mxu0 0.0
  %497 = vmatprep.subr.mxu0 0.0
  %498 = vmatpush1.msra.mxu0 0.0
  %499 = vmatprep.subr.mxu0 0.0
  %500 = vmatpush1.msra.mxu0 0.0
  %501 = vmatprep.subr.mxu0 0.0
  %502 = vmatpush1.msra.mxu0 0.0
  %503 = vmatprep.subr.mxu0 0.0
  %504 = vmatpush1.msra.mxu0 0.0
  %505 = vmatprep.subr.mxu0 0.0
  %506 = vmatpush1.msra.mxu0 0.0
  %507 = vmatprep.subr.mxu0 0.0
  %508 = vmatpush1.msra.mxu0 0.0
  %509 = vmatprep.subr.mxu0 0.0
  %510 = vmatpush1.msra.mxu0 0.0
  %511 = vmatprep.subr.mxu0 0.0
  %512 = vmatpush1.msra.mxu0 0.0
  %513 = vmatprep.subr.mxu0 0.0
  %514 = vmatpush1.msra.mxu0 0.0
  %515 = vmatprep.subr.mxu0 0.0
  %516 = vmatpush1.msra.mxu0 0.0
  %517 = vmatprep.subr.mxu0 0.0
  %518 = vmatpush1.msra.mxu0 0.0
  %519 = vmatprep.mubr.f32.mxu0 0.0
  %520 = vmatmul.mubr.f32.gmra.mrb[0].mxu0 %v453
  %v521 = vpop.f32.mrb[0].mxu0
  %v522 = vadd.f32 0.0, %v521
  %v523 = vpop.f32.mrb[0].mxu0
  %524 = vdwg.mxu0
  %526 = vrot.lane.b32.xlu0 %v522, 32
  %v527 = vpop.permute.xlu0 %526
  %vm529 = vcmask 523520
  %530 = vst.msk [vmem:[%s9] sm:$0xff] %vm529, %v527
  %531 = vset.pattern.permute.xlu0 2
  %532 = vperm.xlu0 %531, %v315
  %v533 = vpop.permute.xlu0 %532
  %v535 = vlaneseq
  %v536 = vshrl.u32 %v535, 7
  %v537 = vsub.s32 2, %v536
  %v538 = vrot.slane %v223, %v537
  %v539 = vadd.f32 %v533, %v538
  %vm540 = vcmp.ge.f32.partialorder %v539, 0.0
  %v541 = vmul.f32 %v539, 0.2
  %v542 = vsel %vm540, %v539, %v541
  %v543 = vadd.f32 %v542, %v322
  %v544 = vsel %vm337, %v543, -inf
  %545 = vmax.xlane.f32.xlu0 %v544
  %v546 = vpop.xlane.xlu0 %545
  %v547 = vsub.f32 %v543, %v546
  %v548 = vmul.f32 %v547, 1.442695
  %v549 = vpow.pop %v548
  %v550 = vsel %vm337, %v549, 0.0
  %551 = vadd.xlane.f32.xlu0 %v550
  %v552 = vpop.xlane.xlu0 %551
  %v553 = vrcp.pop %v552
  %v554 = vmul.f32 %v549, %v553
  %555 = vrot.lane.b32.xlu0 %v118, 64
  %v556 = vpop.permute.xlu0 %555
  %v559 = vsel %vm337, %v554, 0
  %561 = vmatprep.subr.mxu0 0.0
  %562 = vmatpush1.msra.mxu0 %v556
  %563 = vmatprep.subr.mxu0 0.0
  %564 = vmatpush1.msra.mxu0 0.0
  %565 = vmatprep.subr.mxu0 0.0
  %566 = vmatpush1.msra.mxu0 0.0
  %567 = vmatprep.subr.mxu0 0.0
  %568 = vmatpush1.msra.mxu0 0.0
  %569 = vmatprep.subr.mxu0 0.0
  %570 = vmatpush1.msra.mxu0 0.0
  %571 = vmatprep.subr.mxu0 0.0
  %572 = vmatpush1.msra.mxu0 0.0
  %573 = vmatprep.subr.mxu0 0.0
  %574 = vmatpush1.msra.mxu0 0.0
  %575 = vmatprep.subr.mxu0 0.0
  %576 = vmatpush1.msra.mxu0 0.0
  %577 = vmatprep.subr.mxu0 0.0
  %578 = vmatpush1.msra.mxu0 0.0
  %579 = vmatprep.subr.mxu0 0.0
  %580 = vmatpush1.msra.mxu0 0.0
  %581 = vmatprep.subr.mxu0 0.0
  %582 = vmatpush1.msra.mxu0 0.0
  %583 = vmatprep.subr.mxu0 0.0
  %584 = vmatpush1.msra.mxu0 0.0
  %585 = vmatprep.subr.mxu0 0.0
  %586 = vmatpush1.msra.mxu0 0.0
  %587 = vmatprep.subr.mxu0 0.0
  %588 = vmatpush1.msra.mxu0 0.0
  %589 = vmatprep.subr.mxu0 0.0
  %590 = vmatpush1.msra.mxu0 0.0
  %591 = vmatprep.subr.mxu0 0.0
  %592 = vmatpush1.msra.mxu0 0.0
  %593 = vmatprep.subr.mxu0 0.0
  %594 = vmatpush1.msra.mxu0 0.0
  %595 = vmatprep.subr.mxu0 0.0
  %596 = vmatpush1.msra.mxu0 0.0
  %597 = vmatprep.subr.mxu0 0.0
  %598 = vmatpush1.msra.mxu0 0.0
  %599 = vmatprep.subr.mxu0 0.0
  %600 = vmatpush1.msra.mxu0 0.0
  %601 = vmatprep.subr.mxu0 0.0
  %602 = vmatpush1.msra.mxu0 0.0
  %603 = vmatprep.subr.mxu0 0.0
  %604 = vmatpush1.msra.mxu0 0.0
  %605 = vmatprep.subr.mxu0 0.0
  %606 = vmatpush1.msra.mxu0 0.0
  %607 = vmatprep.subr.mxu0 0.0
  %608 = vmatpush1.msra.mxu0 0.0
  %609 = vmatprep.subr.mxu0 0.0
  %610 = vmatpush1.msra.mxu0 0.0
  %611 = vmatprep.subr.mxu0 0.0
  %612 = vmatpush1.msra.mxu0 0.0
  %613 = vmatprep.subr.mxu0 0.0
  %614 = vmatpush1.msra.mxu0 0.0
  %615 = vmatprep.subr.mxu0 0.0
  %616 = vmatpush1.msra.mxu0 0.0
  %617 = vmatprep.subr.mxu0 0.0
  %618 = vmatpush1.msra.mxu0 0.0
  %619 = vmatprep.subr.mxu0 0.0
  %620 = vmatpush1.msra.mxu0 0.0
  %621 = vmatprep.subr.mxu0 0.0
  %622 = vmatpush1.msra.mxu0 0.0
  %623 = vmatprep.subr.mxu0 0.0
  %624 = vmatpush1.msra.mxu0 0.0
  %625 = vmatprep.mubr.f32.mxu0 0.0
  %626 = vmatmul.mubr.f32.gmra.mrb[0].mxu0 %v559
  %v627 = vpop.f32.mrb[0].mxu0
  %v628 = vadd.f32 0.0, %v627
  %v629 = vpop.f32.mrb[0].mxu0
  %630 = vdwg.mxu0
  %632 = vrot.lane.b32.xlu0 %v628, 64
  %v633 = vpop.permute.xlu0 %632
  %vm635 = vcmask 785920
  %636 = vst.msk [vmem:[%s9] sm:$0xff] %vm635, %v633
  %637 = vset.pattern.permute.xlu0 3
  %638 = vperm.xlu0 %637, %v315
  %v639 = vpop.permute.xlu0 %638
  %v641 = vlaneseq
  %v642 = vshrl.u32 %v641, 7
  %v643 = vsub.s32 3, %v642
  %v644 = vrot.slane %v223, %v643
  %v645 = vadd.f32 %v639, %v644
  %vm646 = vcmp.ge.f32.partialorder %v645, 0.0
  %v647 = vmul.f32 %v645, 0.2
  %v648 = vsel %vm646, %v645, %v647
  %v649 = vadd.f32 %v648, %v322
  %v650 = vsel %vm337, %v649, -inf
  %651 = vmax.xlane.f32.xlu0 %v650
  %v652 = vpop.xlane.xlu0 %651
  %v653 = vsub.f32 %v649, %v652
  %v654 = vmul.f32 %v653, 1.442695
  %v655 = vpow.pop %v654
  %v656 = vsel %vm337, %v655, 0.0
  %657 = vadd.xlane.f32.xlu0 %v656
  %v658 = vpop.xlane.xlu0 %657
  %v659 = vrcp.pop %v658
  %v660 = vmul.f32 %v655, %v659
  %661 = vrot.lane.b32.xlu0 %v118, 32
  %v662 = vpop.permute.xlu0 %661
  %v665 = vsel %vm337, %v660, 0
  %667 = vmatprep.subr.mxu0 0.0
  %668 = vmatpush1.msra.mxu0 %v662
  %669 = vmatprep.subr.mxu0 0.0
  %670 = vmatpush1.msra.mxu0 0.0
  %671 = vmatprep.subr.mxu0 0.0
  %672 = vmatpush1.msra.mxu0 0.0
  %673 = vmatprep.subr.mxu0 0.0
  %674 = vmatpush1.msra.mxu0 0.0
  %675 = vmatprep.subr.mxu0 0.0
  %676 = vmatpush1.msra.mxu0 0.0
  %677 = vmatprep.subr.mxu0 0.0
  %678 = vmatpush1.msra.mxu0 0.0
  %679 = vmatprep.subr.mxu0 0.0
  %680 = vmatpush1.msra.mxu0 0.0
  %681 = vmatprep.subr.mxu0 0.0
  %682 = vmatpush1.msra.mxu0 0.0
  %683 = vmatprep.subr.mxu0 0.0
  %684 = vmatpush1.msra.mxu0 0.0
  %685 = vmatprep.subr.mxu0 0.0
  %686 = vmatpush1.msra.mxu0 0.0
  %687 = vmatprep.subr.mxu0 0.0
  %688 = vmatpush1.msra.mxu0 0.0
  %689 = vmatprep.subr.mxu0 0.0
  %690 = vmatpush1.msra.mxu0 0.0
  %691 = vmatprep.subr.mxu0 0.0
  %692 = vmatpush1.msra.mxu0 0.0
  %693 = vmatprep.subr.mxu0 0.0
  %694 = vmatpush1.msra.mxu0 0.0
  %695 = vmatprep.subr.mxu0 0.0
  %696 = vmatpush1.msra.mxu0 0.0
  %697 = vmatprep.subr.mxu0 0.0
  %698 = vmatpush1.msra.mxu0 0.0
  %699 = vmatprep.subr.mxu0 0.0
  %700 = vmatpush1.msra.mxu0 0.0
  %701 = vmatprep.subr.mxu0 0.0
  %702 = vmatpush1.msra.mxu0 0.0
  %703 = vmatprep.subr.mxu0 0.0
  %704 = vmatpush1.msra.mxu0 0.0
  %705 = vmatprep.subr.mxu0 0.0
  %706 = vmatpush1.msra.mxu0 0.0
  %707 = vmatprep.subr.mxu0 0.0
  %708 = vmatpush1.msra.mxu0 0.0
  %709 = vmatprep.subr.mxu0 0.0
  %710 = vmatpush1.msra.mxu0 0.0
  %711 = vmatprep.subr.mxu0 0.0
  %712 = vmatpush1.msra.mxu0 0.0
  %713 = vmatprep.subr.mxu0 0.0
  %714 = vmatpush1.msra.mxu0 0.0
  %715 = vmatprep.subr.mxu0 0.0
  %716 = vmatpush1.msra.mxu0 0.0
  %717 = vmatprep.subr.mxu0 0.0
  %718 = vmatpush1.msra.mxu0 0.0
  %719 = vmatprep.subr.mxu0 0.0
  %720 = vmatpush1.msra.mxu0 0.0
  %721 = vmatprep.subr.mxu0 0.0
  %722 = vmatpush1.msra.mxu0 0.0
  %723 = vmatprep.subr.mxu0 0.0
  %724 = vmatpush1.msra.mxu0 0.0
  %725 = vmatprep.subr.mxu0 0.0
  %726 = vmatpush1.msra.mxu0 0.0
  %727 = vmatprep.subr.mxu0 0.0
  %728 = vmatpush1.msra.mxu0 0.0
  %729 = vmatprep.subr.mxu0 0.0
  %730 = vmatpush1.msra.mxu0 0.0
  %731 = vmatprep.mubr.f32.mxu0 0.0
  %732 = vmatmul.mubr.f32.gmra.mrb[0].mxu0 %v665
  %v733 = vpop.f32.mrb[0].mxu0
  %v734 = vadd.f32 0.0, %v733
  %v735 = vpop.f32.mrb[0].mxu0
  %736 = vdwg.mxu0
  %738 = vrot.lane.b32.xlu0 %v734, 96
  %v739 = vpop.permute.xlu0 %738
  %vm741 = vcmask 1048320
  %742 = vst.msk [vmem:[%s9] sm:$0xff] %vm741, %v739
  %v743 = vld [vmem:[%s9] sm:$0xff]
  %v744 = vld [vmem:[%s5] sm:$0xff]
  %v745 = vld [vmem:[%s5 + $0x8] sm:$0xff]
  %v746 = vld [vmem:[%s5 + $0x10] sm:$0x1f]
  %v748 = vsel %vm47, %v746, 0
  %750 = vmatprep.subr.mxu0 0.0
  %751 = vmatpush1.msra.mxu0 %v744
  %752 = vmatprep.subr.mxu0 0.0
  %753 = vmatpush1.msra.mxu0 %v745
  %754 = vmatprep.subr.mxu0 0.0
  %755 = vmatpush1.msra.mxu0 %v748
  %756 = vmatprep.subr.mxu0 0.0
  %757 = vmatpush1.msra.mxu0 0.0
  %758 = vmatprep.subr.mxu0 0.0
  %759 = vmatpush1.msra.mxu0 0.0
  %760 = vmatprep.subr.mxu0 0.0
  %761 = vmatpush1.msra.mxu0 0.0
  %762 = vmatprep.subr.mxu0 0.0
  %763 = vmatpush1.msra.mxu0 0.0
  %764 = vmatprep.subr.mxu0 0.0
  %765 = vmatpush1.msra.mxu0 0.0
  %766 = vmatprep.subr.mxu0 0.0
  %767 = vmatpush1.msra.mxu0 0.0
  %768 = vmatprep.subr.mxu0 0.0
  %769 = vmatpush1.msra.mxu0 0.0
  %770 = vmatprep.subr.mxu0 0.0
  %771 = vmatpush1.msra.mxu0 0.0
  %772 = vmatprep.subr.mxu0 0.0
  %773 = vmatpush1.msra.mxu0 0.0
  %774 = vmatprep.subr.mxu0 0.0
  %775 = vmatpush1.msra.mxu0 0.0
  %776 = vmatprep.subr.mxu0 0.0
  %777 = vmatpush1.msra.mxu0 0.0
  %778 = vmatprep.subr.mxu0 0.0
  %779 = vmatpush1.msra.mxu0 0.0
  %780 = vmatprep.subr.mxu0 0.0
  %781 = vmatpush1.msra.mxu0 0.0
  %782 = vmatprep.subr.mxu0 0.0
  %783 = vmatpush1.msra.mxu0 0.0
  %784 = vmatprep.subr.mxu0 0.0
  %785 = vmatpush1.msra.mxu0 0.0
  %786 = vmatprep.subr.mxu0 0.0
  %787 = vmatpush1.msra.mxu0 0.0
  %788 = vmatprep.subr.mxu0 0.0
  %789 = vmatpush1.msra.mxu0 0.0
  %790 = vmatprep.subr.mxu0 0.0
  %791 = vmatpush1.msra.mxu0 0.0
  %792 = vmatprep.subr.mxu0 0.0
  %793 = vmatpush1.msra.mxu0 0.0
  %794 = vmatprep.subr.mxu0 0.0
  %795 = vmatpush1.msra.mxu0 0.0
  %796 = vmatprep.subr.mxu0 0.0
  %797 = vmatpush1.msra.mxu0 0.0
  %798 = vmatprep.subr.mxu0 0.0
  %799 = vmatpush1.msra.mxu0 0.0
  %800 = vmatprep.subr.mxu0 0.0
  %801 = vmatpush1.msra.mxu0 0.0
  %802 = vmatprep.subr.mxu0 0.0
  %803 = vmatpush1.msra.mxu0 0.0
  %804 = vmatprep.subr.mxu0 0.0
  %805 = vmatpush1.msra.mxu0 0.0
  %806 = vmatprep.subr.mxu0 0.0
  %807 = vmatpush1.msra.mxu0 0.0
  %808 = vmatprep.subr.mxu0 0.0
  %809 = vmatpush1.msra.mxu0 0.0
  %810 = vmatprep.subr.mxu0 0.0
  %811 = vmatpush1.msra.mxu0 0.0
  %812 = vmatprep.subr.mxu0 0.0
  %813 = vmatpush1.msra.mxu0 0.0
  %814 = vmatprep.mubr.f32.mxu0 0.0
  %815 = vmatmul.mubr.f32.gmra.mrb[0].mxu0 %v243
  %v816 = vpop.f32.mrb[0].mxu0
  %v817 = vadd.f32 0.0, %v816
  %v818 = vpop.f32.mrb[0].mxu0
  %819 = vdwg.mxu0
  %v820 = vadd.f32 %v743, %v817
  %v821 = vld [vmem:[%s6] sm:$0x1]
  %v823 = vlaneseq
  %v824 = vshrl.u32 %v823, 7
  %v825 = vsub.s32 0, %v824
  %v826 = vrot.slane %v821, %v825
  %v828 = vadd.f32 %v820, %v826
  %v829 = vmax.f32 %v828, 0.0
  %830 = vst [vmem:[%s9] sm:$0xff] %v829
  %v831 = vld [vmem:[%s7] sm:$0xff]
  %v832 = vld [vmem:[%s7 + $0x8] sm:$0xff]
  %v833 = vld [vmem:[%s7 + $0x10] sm:$0xff]
  %v834 = vld [vmem:[%s7 + $0x18] sm:$0xff]
  %v835 = vld [vmem:[%s7 + $0x20] sm:$0xff]
  %v836 = vld [vmem:[%s7 + $0x28] sm:$0xff]
  %v837 = vld [vmem:[%s7 + $0x30] sm:$0xff]
  %v838 = vld [vmem:[%s7 + $0x38] sm:$0xff]
  %v839 = vld [vmem:[%s7 + $0x40] sm:$0xff]
  %v840 = vld [vmem:[%s7 + $0x48] sm:$0xff]
  %v841 = vld [vmem:[%s7 + $0x50] sm:$0xff]
  %v842 = vld [vmem:[%s7 + $0x58] sm:$0xff]
  %v843 = vld [vmem:[%s7 + $0x60] sm:$0xff]
  %v844 = vld [vmem:[%s7 + $0x68] sm:$0xff]
  %v845 = vld [vmem:[%s7 + $0x70] sm:$0xff]
  %v846 = vld [vmem:[%s7 + $0x78] sm:$0xff]
  %847 = vmatprep.subr.mxu0 0.0
  %848 = vmatpush1.msra.mxu0 %v831
  %849 = vmatprep.subr.mxu0 0.0
  %850 = vmatpush1.msra.mxu0 %v832
  %851 = vmatprep.subr.mxu0 0.0
  %852 = vmatpush1.msra.mxu0 %v833
  %853 = vmatprep.subr.mxu0 0.0
  %854 = vmatpush1.msra.mxu0 %v834
  %855 = vmatprep.subr.mxu0 0.0
  %856 = vmatpush1.msra.mxu0 %v835
  %857 = vmatprep.subr.mxu0 0.0
  %858 = vmatpush1.msra.mxu0 %v836
  %859 = vmatprep.subr.mxu0 0.0
  %860 = vmatpush1.msra.mxu0 %v837
  %861 = vmatprep.subr.mxu0 0.0
  %862 = vmatpush1.msra.mxu0 %v838
  %863 = vmatprep.subr.mxu0 0.0
  %864 = vmatpush1.msra.mxu0 %v839
  %865 = vmatprep.subr.mxu0 0.0
  %866 = vmatpush1.msra.mxu0 %v840
  %867 = vmatprep.subr.mxu0 0.0
  %868 = vmatpush1.msra.mxu0 %v841
  %869 = vmatprep.subr.mxu0 0.0
  %870 = vmatpush1.msra.mxu0 %v842
  %871 = vmatprep.subr.mxu0 0.0
  %872 = vmatpush1.msra.mxu0 %v843
  %873 = vmatprep.subr.mxu0 0.0
  %874 = vmatpush1.msra.mxu0 %v844
  %875 = vmatprep.subr.mxu0 0.0
  %876 = vmatpush1.msra.mxu0 %v845
  %877 = vmatprep.subr.mxu0 0.0
  %878 = vmatpush1.msra.mxu0 %v846
  %879 = vmatprep.subr.mxu0 0.0
  %880 = vmatpush1.msra.mxu0 0.0
  %881 = vmatprep.subr.mxu0 0.0
  %882 = vmatpush1.msra.mxu0 0.0
  %883 = vmatprep.subr.mxu0 0.0
  %884 = vmatpush1.msra.mxu0 0.0
  %885 = vmatprep.subr.mxu0 0.0
  %886 = vmatpush1.msra.mxu0 0.0
  %887 = vmatprep.subr.mxu0 0.0
  %888 = vmatpush1.msra.mxu0 0.0
  %889 = vmatprep.subr.mxu0 0.0
  %890 = vmatpush1.msra.mxu0 0.0
  %891 = vmatprep.subr.mxu0 0.0
  %892 = vmatpush1.msra.mxu0 0.0
  %893 = vmatprep.subr.mxu0 0.0
  %894 = vmatpush1.msra.mxu0 0.0
  %895 = vmatprep.subr.mxu0 0.0
  %896 = vmatpush1.msra.mxu0 0.0
  %897 = vmatprep.subr.mxu0 0.0
  %898 = vmatpush1.msra.mxu0 0.0
  %899 = vmatprep.subr.mxu0 0.0
  %900 = vmatpush1.msra.mxu0 0.0
  %901 = vmatprep.subr.mxu0 0.0
  %902 = vmatpush1.msra.mxu0 0.0
  %903 = vmatprep.subr.mxu0 0.0
  %904 = vmatpush1.msra.mxu0 0.0
  %905 = vmatprep.subr.mxu0 0.0
  %906 = vmatpush1.msra.mxu0 0.0
  %907 = vmatprep.subr.mxu0 0.0
  %908 = vmatpush1.msra.mxu0 0.0
  %909 = vmatprep.subr.mxu0 0.0
  %910 = vmatpush1.msra.mxu0 0.0
  %911 = vmatprep.mubr.f32.mxu0 0.0
  %912 = vmatmul.mubr.f32.gmra.mrb[0].mxu0 %v829
  %v913 = vpop.f32.mrb[0].mxu0
  %v914 = vadd.f32 0.0, %v913
  %v915 = vpop.f32.mrb[0].mxu0
  %916 = vdwg.mxu0
  %917 = vst [vmem:[%s10] sm:$0xff] %v914
  %v918 = vld [vmem:[%s8] sm:$0xff]
  %v919 = vld [vmem:[%s8 + $0x8] sm:$0xff]
  %v920 = vld [vmem:[%s8 + $0x10] sm:$0xff]
  %v921 = vld [vmem:[%s8 + $0x18] sm:$0xff]
  %v922 = vld [vmem:[%s8 + $0x20] sm:$0xff]
  %v923 = vld [vmem:[%s8 + $0x28] sm:$0xff]
  %v924 = vld [vmem:[%s8 + $0x30] sm:$0xff]
  %v925 = vld [vmem:[%s8 + $0x38] sm:$0xff]
  %v926 = vld [vmem:[%s8 + $0x40] sm:$0xff]
  %v927 = vld [vmem:[%s8 + $0x48] sm:$0xff]
  %v928 = vld [vmem:[%s8 + $0x50] sm:$0xff]
  %v929 = vld [vmem:[%s8 + $0x58] sm:$0xff]
  %v930 = vld [vmem:[%s8 + $0x60] sm:$0xff]
  %v931 = vld [vmem:[%s8 + $0x68] sm:$0xff]
  %v932 = vld [vmem:[%s8 + $0x70] sm:$0xff]
  %v933 = vld [vmem:[%s8 + $0x78] sm:$0xff]
  %934 = vmatprep.subr.mxu0 0.0
  %935 = vmatpush1.msra.mxu0 %v918
  %936 = vmatprep.subr.mxu0 0.0
  %937 = vmatpush1.msra.mxu0 %v919
  %938 = vmatprep.subr.mxu0 0.0
  %939 = vmatpush1.msra.mxu0 %v920
  %940 = vmatprep.subr.mxu0 0.0
  %941 = vmatpush1.msra.mxu0 %v921
  %942 = vmatprep.subr.mxu0 0.0
  %943 = vmatpush1.msra.mxu0 %v922
  %944 = vmatprep.subr.mxu0 0.0
  %945 = vmatpush1.msra.mxu0 %v923
  %946 = vmatprep.subr.mxu0 0.0
  %947 = vmatpush1.msra.mxu0 %v924
  %948 = vmatprep.subr.mxu0 0.0
  %949 = vmatpush1.msra.mxu0 %v925
  %950 = vmatprep.subr.mxu0 0.0
  %951 = vmatpush1.msra.mxu0 %v926
  %952 = vmatprep.subr.mxu0 0.0
  %953 = vmatpush1.msra.mxu0 %v927
  %954 = vmatprep.subr.mxu0 0.0
  %955 = vmatpush1.msra.mxu0 %v928
  %956 = vmatprep.subr.mxu0 0.0
  %957 = vmatpush1.msra.mxu0 %v929
  %958 = vmatprep.subr.mxu0 0.0
  %959 = vmatpush1.msra.mxu0 %v930
  %960 = vmatprep.subr.mxu0 0.0
  %961 = vmatpush1.msra.mxu0 %v931
  %962 = vmatprep.subr.mxu0 0.0
  %963 = vmatpush1.msra.mxu0 %v932
  %964 = vmatprep.subr.mxu0 0.0
  %965 = vmatpush1.msra.mxu0 %v933
  %966 = vmatprep.subr.mxu0 0.0
  %967 = vmatpush1.msra.mxu0 0.0
  %968 = vmatprep.subr.mxu0 0.0
  %969 = vmatpush1.msra.mxu0 0.0
  %970 = vmatprep.subr.mxu0 0.0
  %971 = vmatpush1.msra.mxu0 0.0
  %972 = vmatprep.subr.mxu0 0.0
  %973 = vmatpush1.msra.mxu0 0.0
  %974 = vmatprep.subr.mxu0 0.0
  %975 = vmatpush1.msra.mxu0 0.0
  %976 = vmatprep.subr.mxu0 0.0
  %977 = vmatpush1.msra.mxu0 0.0
  %978 = vmatprep.subr.mxu0 0.0
  %979 = vmatpush1.msra.mxu0 0.0
  %980 = vmatprep.subr.mxu0 0.0
  %981 = vmatpush1.msra.mxu0 0.0
  %982 = vmatprep.subr.mxu0 0.0
  %983 = vmatpush1.msra.mxu0 0.0
  %984 = vmatprep.subr.mxu0 0.0
  %985 = vmatpush1.msra.mxu0 0.0
  %986 = vmatprep.subr.mxu0 0.0
  %987 = vmatpush1.msra.mxu0 0.0
  %988 = vmatprep.subr.mxu0 0.0
  %989 = vmatpush1.msra.mxu0 0.0
  %990 = vmatprep.subr.mxu0 0.0
  %991 = vmatpush1.msra.mxu0 0.0
  %992 = vmatprep.subr.mxu0 0.0
  %993 = vmatpush1.msra.mxu0 0.0
  %994 = vmatprep.subr.mxu0 0.0
  %995 = vmatpush1.msra.mxu0 0.0
  %996 = vmatprep.subr.mxu0 0.0
  %997 = vmatpush1.msra.mxu0 0.0
  %998 = vmatprep.mubr.f32.mxu0 0.0
  %999 = vmatmul.mubr.f32.gmra.mrb[0].mxu0 %v914
  %v1000 = vpop.f32.mrb[0].mxu0
  %v1001 = vadd.f32 0.0, %v1000
  %v1002 = vpop.f32.mrb[0].mxu0
  %1003 = vdwg.mxu0
  %1004 = vxpose.xlu0.b32.start [1/16] %v1001, 128
  %1005 = vxpose.xlu0.b32.cont [2/16] 0.0, 128
  %1006 = vxpose.xlu0.b32.cont [3/16] 0.0, 128
  %1007 = vxpose.xlu0.b32.cont [4/16] 0.0, 128
  %1008 = vxpose.xlu0.b32.cont [5/16] 0.0, 128
  %1009 = vxpose.xlu0.b32.cont [6/16] 0.0, 128
  %1010 = vxpose.xlu0.b32.cont [7/16] 0.0, 128
  %1011 = vxpose.xlu0.b32.cont [8/16] 0.0, 128
  %1012 = vxpose.xlu0.b32.cont [9/16] 0.0, 128
  %1013 = vxpose.xlu0.b32.cont [10/16] 0.0, 128
  %1014 = vxpose.xlu0.b32.cont [11/16] 0.0, 128
  %1015 = vxpose.xlu0.b32.cont [12/16] 0.0, 128
  %1016 = vxpose.xlu0.b32.cont [13/16] 0.0, 128
  %1017 = vxpose.xlu0.b32.cont [14/16] 0.0, 128
  %1018 = vxpose.xlu0.b32.cont [15/16] 0.0, 128
  %1019 = vxpose.xlu0.b32.end [16/16] 0.0, 128
  %v1020 = vpop.trf.xlu0
  %v1021 = vpop.trf.xlu0
  %v1022 = vpop.trf.xlu0
  %v1023 = vpop.trf.xlu0
  %v1024 = vpop.trf.xlu0
  %v1025 = vpop.trf.xlu0
  %v1026 = vpop.trf.xlu0
  %v1027 = vpop.trf.xlu0
  %v1028 = vpop.trf.xlu0
  %v1029 = vpop.trf.xlu0
  %v1030 = vpop.trf.xlu0
  %v1031 = vpop.trf.xlu0
  %v1032 = vpop.trf.xlu0
  %v1033 = vpop.trf.xlu0
  %v1034 = vpop.trf.xlu0
  %v1035 = vpop.trf.xlu0
  %vm1036 = vcmask 60416
  %1037 = vst.msk [vmem:[%s11] sm:$0xf] %vm1036, %v1020
  %1039 = vrot.lane.b32.xlu0 %v1001, 124
  %v1040 = vpop.permute.xlu0 %1039
  %vm1042 = vcmask 31744
  %1043 = vst.msk [vmem:[%s12] sm:$0xff] %vm1042, %v1040
  // Predicated region
  $region38: #{gnn_forward.2} parent=0 // pred_check
    _
  $region39: #{gnn_forward.2} parent=0 // pred_check_branch
    %1045 = sbr.rel (0) target = $region41
  $region40: #{gnn_forward.2} parent=0 // pred_region
    _
  $region41: #{gnn_forward.2} parent=0 // pred_fallthru
    _
  // Predicated region
  $region42: #{gnn_forward.2} parent=0 // pred_check
    _
  $region43: #{gnn_forward.2} parent=0 // pred_check_branch
    %1047 = sbr.rel (0) target = $region45
  $region44: #{gnn_forward.2} parent=0 // pred_region
    _
  $region45: #{gnn_forward.2} parent=0 // pred_fallthru
    _
  // Predicated region
  $region46: #{gnn_forward.2} parent=0 // pred_check
    _
  $region47: #{gnn_forward.2} parent=0 // pred_check_branch
    %1049 = sbr.rel (0) target = $region49
  $region48: #{gnn_forward.2} parent=0 // pred_region
    _
  $region49: #{gnn_forward.2} parent=0 // pred_fallthru
    _
  // Predicated region
  $region50: #{gnn_forward.2} parent=0 // pred_check
    _
  $region51: #{gnn_forward.2} parent=0 // pred_check_branch
    %1051 = sbr.rel (0) target = $region53
  $region52: #{gnn_forward.2} parent=0 // pred_region
    _
  $region53: #{gnn_forward.2} parent=0 // pred_fallthru
    _
  // Predicated region
  $region54: #{gnn_forward.2} parent=0 // pred_check
    _
  $region55: #{gnn_forward.2} parent=0 // pred_check_branch
    %1053 = sbr.rel (0) target = $region57
  $region56: #{gnn_forward.2} parent=0 // pred_region
    _
  $region57: #{gnn_forward.2} parent=0 // pred_fallthru
    _
  // Predicated region
  $region58: #{gnn_forward.2} parent=0 // pred_check
    _
  $region59: #{gnn_forward.2} parent=0 // pred_check_branch
    %1055 = sbr.rel (0) target = $region61
  $region60: #{gnn_forward.2} parent=0 // pred_region
    _
  $region61: #{gnn_forward.2} parent=0 // pred_fallthru
    _
  // Predicated region
  $region62: #{gnn_forward.2} parent=0 // pred_check
    _
  $region63: #{gnn_forward.2} parent=0 // pred_check_branch
    %1057 = sbr.rel (0) target = $region65
  $region64: #{gnn_forward.2} parent=0 // pred_region
    _
  $region65: #{gnn_forward.2} parent=0 // pred_fallthru
    _
  // Predicated region
  $region66: #{gnn_forward.2} parent=0 // pred_check
    _
  $region67: #{gnn_forward.2} parent=0 // pred_check_branch
    %1059 = sbr.rel (0) target = $region69
  $region68: #{gnn_forward.2} parent=0 // pred_region
    _
  $region69: #{gnn_forward.2} parent=0 // pred_fallthru
    _

</llo_original>
